<compile_context>
chip_gen: v7x
topology: tpu7x:2x2x1
jax: 0.10.0
libtpu: 0.0.40
codegen_flags: <defaults>
</compile_context>

<pallas_src>
import functools
import math

import jax
import jax.numpy as jnp
from jax import lax
from jax.experimental import pallas as pl
from jax.experimental.pallas import tpu as pltpu

_LN_EPS = 1e-5  # PyTorch nn.LayerNorm default eps


def _round_up(x, m):
    return (x + m - 1) // m * m


def _largest_divisor(total, limit, step=1):
    """Largest divisor of `total` that is <= limit and a multiple of `step`."""
    best = None
    d = step
    top = min(total, limit)
    while d <= top:
        if total % d == 0:
            best = d
        d += step
    return best if best is not None else total


def _layernorm(v, gamma, beta, n_true):
    """LayerNorm over the last axis with fused single-pass statistics.

    `n_true` is the logical feature count.  Padded columns of `v` are
    guaranteed to be exactly zero, so summing over the padded width and
    dividing by `n_true` reproduces the unpadded statistics, and gamma=beta=0
    on padded columns keeps their output exactly zero.
    """
    inv_n = 1.0 / n_true
    s1 = jnp.sum(v, axis=-1, keepdims=True)
    s2 = jnp.sum(v * v, axis=-1, keepdims=True)
    mu = s1 * inv_n
    var = jnp.maximum(s2 * inv_n - mu * mu, 0.0)  # biased variance, like PyTorch
    return (v - mu) * lax.rsqrt(var + _LN_EPS) * gamma + beta


def snn_kernel(x_ref, w_in_ref, b_in_ref, g_in_ref, bt_in_ref,
               w_hid_ref, b_hid_ref, g_hid_ref, bt_hid_ref,
               tau_m_ref, tau_n_ref, mem0_ref,
               w_ro_ref, b_ro_ref, g_ro_ref, bt_ro_ref,
               out_ref, spike_seq_ref,
               ic_ref, mem_ref, dinp_ref, pspk_ref, ssum_ref,
               *, tt, bb, h_true, o_true, seq_len, vth, dt):
    t_id = pl.program_id(1)
    n_t = pl.num_programs(1)
    h_pad = mem_ref.shape[1]

    # ---- per-batch-block carry init at the first time tile ------------------
    @pl.when(t_id == 0)
    def _():
        mem_ref[...] = mem0_ref[...]
        dinp_ref[...] = jnp.zeros_like(dinp_ref)
        pspk_ref[...] = jnp.zeros_like(pspk_ref)
        ssum_ref[...] = jnp.zeros_like(ssum_ref)

    # ---- bulk input path for this time tile (one MXU matmul + fused LN) -----
    d_in = x_ref.shape[-1]
    x_blk = x_ref[...].reshape(tt * bb, d_in)
    pre_in = jnp.dot(x_blk, w_in_ref[...],
                     preferred_element_type=jnp.float32) + b_in_ref[...]
    ic = _layernorm(pre_in, g_in_ref[...], bt_in_ref[...], h_true)
    ic_ref[...] = ic.reshape(tt, bb, h_pad).astype(ic_ref.dtype)

    # ---- recurrent weights resident across the loop; broadcasts hoisted -----
    w_hid = w_hid_ref[...]                                        # [H_pad, H_pad] bf16
    b_hid = jnp.broadcast_to(b_hid_ref[...], (bb, h_pad))
    g_hid = jnp.broadcast_to(g_hid_ref[...], (bb, h_pad))
    bt_hid = jnp.broadcast_to(bt_hid_ref[...], (bb, h_pad))

    alpha = jnp.exp(-dt / jnp.maximum(tau_m_ref[...], 0.01))      # [1, H_pad]
    sig_n = jax.nn.sigmoid(tau_n_ref[...])                        # [1, H_pad]
    alpha_b = jnp.broadcast_to(alpha, (bb, h_pad))
    oma_b = jnp.broadcast_to(1.0 - alpha, (bb, h_pad))
    sig_b = jnp.broadcast_to(sig_n, (bb, h_pad))
    oms_b = jnp.broadcast_to(1.0 - sig_n, (bb, h_pad))

    def step(s, carry):
        mem, d_input, prev_spike, spike_sum = carry
        input_current = ic_ref[s].astype(jnp.float32)

        # Recurrent path: dense_hidden + layernorm_hidden (bf16 MXU, f32 acc/LN).
        hidden_pre = jnp.dot(prev_spike, w_hid,
                             preferred_element_type=jnp.float32) + b_hid
        hidden_current = _layernorm(hidden_pre, g_hid, bt_hid, h_true)

        # branch == 1: reshape(B, H, branch).sum(dim=2) is the identity.
        combined = input_current + hidden_current

        d_input = sig_b * d_input + oms_b * combined
        mem = alpha_b * mem + oma_b * d_input
        spike = (mem - vth > 0.0).astype(jnp.float32)             # ActFun_adp fwd
        spike_bf16 = spike.astype(spike_seq_ref.dtype)            # single cast/step
        spike_seq_ref[s] = spike_bf16                             # dense (Bb,128k) store
        return mem, d_input, spike_bf16, spike_sum + spike

    unroll = True if tt <= 32 else 4
    mem, d_input, prev_spike, spike_sum = lax.fori_loop(
        0, tt, step,
        (mem_ref[...], dinp_ref[...], pspk_ref[...], ssum_ref[...]),
        unroll=unroll)

    mem_ref[...] = mem
    dinp_ref[...] = d_input
    pspk_ref[...] = prev_spike
    ssum_ref[...] = spike_sum

    # ---- ReadoutLayer at the last time tile: mean -> Linear -> LayerNorm ----
    @pl.when(t_id == n_t - 1)
    def _():
        agg = ssum_ref[...] * (1.0 / seq_len)
        ro = jnp.dot(agg, w_ro_ref[...],
                     preferred_element_type=jnp.float32) + b_ro_ref[...]
        out_ref[...] = _layernorm(ro, g_ro_ref[...], bt_ro_ref[...], o_true)


def make_params(key, input_dim, hidden_dim, output_dim, branch=1):
    # TODO(synk): branch > 1 would need a reshape + sum over the branch axis
    # inside the kernel; SNNModel's default (branch=1) is implemented exactly.
    assert branch == 1
    hb = hidden_dim * branch
    ks = jax.random.split(key, 5)

    def xavier(k, fan_in, fan_out):
        std = (2.0 / (fan_in + fan_out)) ** 0.5
        # stored transposed relative to torch Linear.weight so the kernel does x @ W
        return std * jax.random.normal(k, (fan_in, fan_out), jnp.float32)

    return dict(
        w_in=xavier(ks[0], input_dim, hb),
        b_in=jnp.zeros((1, hb), jnp.float32),
        g_in=jnp.ones((1, hb), jnp.float32),
        bt_in=jnp.zeros((1, hb), jnp.float32),
        w_hid=xavier(ks[1], hidden_dim, hb),
        b_hid=jnp.zeros((1, hb), jnp.float32),
        g_hid=jnp.ones((1, hb), jnp.float32),
        bt_hid=jnp.zeros((1, hb), jnp.float32),
        tau_m=jax.random.uniform(ks[2], (1, hidden_dim), jnp.float32, 2.0, 6.0),
        tau_n=jax.random.uniform(ks[3], (1, hidden_dim), jnp.float32, 2.0, 6.0),
        w_ro=xavier(ks[4], hidden_dim, output_dim),
        b_ro=jnp.zeros((1, output_dim), jnp.float32),
        g_ro=jnp.ones((1, output_dim), jnp.float32),
        bt_ro=jnp.zeros((1, output_dim), jnp.float32),
    )


def _pad2(a, rows, cols, fill=0.0):
    r, c = a.shape
    return jnp.pad(a, ((0, rows - r), (0, cols - c)), constant_values=fill)


def snn_forward(x, params, mem0, *, vth=0.5, dt=1.0,
                time_tile=None, batch_block=None):
    """x: [B, T, D_in] -> (output [B, O] f32, spike_sequence [B, T, H] bf16)."""
    B, T, D = x.shape
    H = params["tau_m"].shape[-1]
    O = params["w_ro"].shape[-1]

    # Lane/sublane-dense padded shapes (numerically silent, see _layernorm).
    h_pad = max(_round_up(H, 128), 128)
    b_pad = max(_round_up(B, 16), 16)       # 16: bf16 sublane packing for MXU operands

    bb = batch_block if batch_block is not None else _largest_divisor(b_pad, 128, 16)
    tt = time_tile if time_tile is not None else _largest_divisor(T, 32, 1)
    n_b, n_t = b_pad // bb, T // tt

    # --- pad parameters once on the host/XLA side ---------------------------
    w_in = _pad2(params["w_in"], D, h_pad).astype(jnp.bfloat16)
    b_in = _pad2(params["b_in"], 1, h_pad)
    g_in = _pad2(params["g_in"], 1, h_pad)          # padded gamma=0 -> padded LN out=0
    bt_in = _pad2(params["bt_in"], 1, h_pad)
    w_hid = _pad2(params["w_hid"], h_pad, h_pad).astype(jnp.bfloat16)
    b_hid = _pad2(params["b_hid"], 1, h_pad)
    g_hid = _pad2(params["g_hid"], 1, h_pad)
    bt_hid = _pad2(params["bt_hid"], 1, h_pad)
    tau_m = _pad2(params["tau_m"], 1, h_pad, fill=1.0)   # benign pad: silent columns
    tau_n = _pad2(params["tau_n"], 1, h_pad, fill=1.0)
    mem0_p = _pad2(mem0.astype(jnp.float32), b_pad, h_pad)
    w_ro = _pad2(params["w_ro"], h_pad, O)
    b_ro, g_ro, bt_ro = params["b_ro"], params["g_ro"], params["bt_ro"]

    # Time-major padded x in bf16 (binary spike inputs are exact in bf16).
    # TODO(synk): consume x natively in [B,T,D] (strided row gather) and emit
    # spike_seq directly in [B,T,H] to drop both wrapper-side HBM transposes.
    x_tm = jnp.transpose(x, (1, 0, 2))
    x_tm = jnp.pad(x_tm, ((0, 0), (0, b_pad - B), (0, 0))).astype(jnp.bfloat16)

    # --- VMEM limit: ~1.3x of the true resident footprint, capped by the part
    param_arrays = (w_in, b_in, g_in, bt_in, w_hid, b_hid, g_hid, bt_hid,
                    tau_m, tau_n, w_ro, b_ro, g_ro, bt_ro)
    param_bytes = sum(int(a.size) * a.dtype.itemsize for a in param_arrays)
    blk_bytes = (tt * bb * D * 2          # x tile (bf16)
                 + tt * bb * h_pad * 2    # spike tile (bf16)
                 + bb * O * 4             # out tile
                 + bb * h_pad * 4)        # mem0 tile
    scratch_bytes = (tt * bb * h_pad * 2              # ic (bf16)
                     + 3 * bb * h_pad * 4             # mem, d_input, spike_sum
                     + bb * h_pad * 2)                # prev_spike (bf16)
    resident = 2 * (param_bytes + blk_bytes) + scratch_bytes   # 2x: double buffering
    vmem_limit = int(1.3 * resident) + (2 << 20)
    try:
        phys_vmem = int(pltpu.get_tpu_info().vmem_capacity_bytes)
    except Exception:
        phys_vmem = 64 << 20              # conservative (v7x-sized) fallback
    vmem_limit = max(min(vmem_limit, int(0.85 * phys_vmem)), 16 << 20)

    in_specs = [
        pl.BlockSpec((tt, bb, D), lambda b, t: (t, b, 0)),        # x (time tiled)
        pl.BlockSpec((D, h_pad), lambda b, t: (0, 0)),            # w_in
        pl.BlockSpec((1, h_pad), lambda b, t: (0, 0)),            # b_in
        pl.BlockSpec((1, h_pad), lambda b, t: (0, 0)),            # g_in
        pl.BlockSpec((1, h_pad), lambda b, t: (0, 0)),            # bt_in
        pl.BlockSpec((h_pad, h_pad), lambda b, t: (0, 0)),        # w_hid
        pl.BlockSpec((1, h_pad), lambda b, t: (0, 0)),            # b_hid
        pl.BlockSpec((1, h_pad), lambda b, t: (0, 0)),            # g_hid
        pl.BlockSpec((1, h_pad), lambda b, t: (0, 0)),            # bt_hid
        pl.BlockSpec((1, h_pad), lambda b, t: (0, 0)),            # tau_m
        pl.BlockSpec((1, h_pad), lambda b, t: (0, 0)),            # tau_n
        pl.BlockSpec((bb, h_pad), lambda b, t: (b, 0)),           # mem0
        pl.BlockSpec((h_pad, O), lambda b, t: (0, 0)),            # w_ro
        pl.BlockSpec((1, O), lambda b, t: (0, 0)),                # b_ro
        pl.BlockSpec((1, O), lambda b, t: (0, 0)),                # g_ro
        pl.BlockSpec((1, O), lambda b, t: (0, 0)),                # bt_ro
    ]
    out_specs = (
        pl.BlockSpec((bb, O), lambda b, t: (b, 0)),               # output (revisited)
        pl.BlockSpec((tt, bb, h_pad), lambda b, t: (t, b, 0)),    # spike_seq (time-major)
    )
    scratch_shapes = [
        pltpu.VMEM((tt, bb, h_pad), jnp.bfloat16),   # per-tile input current
        pltpu.VMEM((bb, h_pad), jnp.float32),        # mem carry
        pltpu.VMEM((bb, h_pad), jnp.float32),        # d_input carry
        pltpu.VMEM((bb, h_pad), jnp.bfloat16),       # prev_spike carry
        pltpu.VMEM((bb, h_pad), jnp.float32),        # spike_sum carry
    ]

    out_pad, spike_tbh = pl.pallas_call(
        functools.partial(snn_kernel, tt=tt, bb=bb, h_true=H, o_true=O,
                          seq_len=T, vth=vth, dt=dt),
        out_shape=(jax.ShapeDtypeStruct((b_pad, O), jnp.float32),
                   jax.ShapeDtypeStruct((T, b_pad, h_pad), jnp.bfloat16)),
        grid_spec=pltpu.PrefetchScalarGridSpec(
            num_scalar_prefetch=0,
            grid=(n_b, n_t),
            in_specs=in_specs,
            out_specs=out_specs,
            scratch_shapes=scratch_shapes),
        compiler_params=pltpu.CompilerParams(
            dimension_semantics=("parallel", "arbitrary"),
            vmem_limit_bytes=vmem_limit),
    )(x_tm, w_in, b_in, g_in, bt_in, w_hid, b_hid, g_hid, bt_hid,
      tau_m, tau_n, mem0_p, w_ro, b_ro, g_ro, bt_ro)

    out = out_pad[:B]
    spike = jnp.transpose(spike_tbh[:, :B, :H], (1, 0, 2))
    return out, spike


if __name__ == "__main__":
    B, T, D_IN, H, O = 2, 8, 16, 32, 10
    key = jax.random.PRNGKey(0)
    k_x, k_p, k_m = jax.random.split(key, 3)

    # Binary spike input sequence, like the spike encoding feeding SNNModel.
    x = (jax.random.uniform(k_x, (B, T, D_IN)) < 0.5).astype(jnp.float32)
    params = make_params(k_p, D_IN, H, O, branch=1)
    # matches `mem = torch.rand(batch_size, hidden_dim)` (made deterministic here)
    mem0 = jax.random.uniform(k_m, (B, H), dtype=jnp.float32)

    out, spike = snn_forward(x, params, mem0, vth=0.5, dt=1.0)
    jax.block_until_ready((out, spike))

    assert out.shape == (B, O) and spike.shape == (B, T, H)
    assert bool(jnp.all(jnp.isfinite(out)))
    sp = spike.astype(jnp.float32)
    assert bool(jnp.all((sp == 0.0) | (sp == 1.0)))
    print("KERNEL_OK")
</pallas_src>

<mosaic_0001>
module attributes {stable_mosaic.version = 11 : i64} {
  func.func @snn_kernel(%arg0: i32, %arg1: i32, %arg2: memref<8x16x16xbf16, #tpu.memory_space<vmem>>, %arg3: memref<16x128xbf16, #tpu.memory_space<vmem>>, %arg4: memref<1x128xf32, #tpu.memory_space<vmem>>, %arg5: memref<1x128xf32, #tpu.memory_space<vmem>>, %arg6: memref<1x128xf32, #tpu.memory_space<vmem>>, %arg7: memref<128x128xbf16, #tpu.memory_space<vmem>>, %arg8: memref<1x128xf32, #tpu.memory_space<vmem>>, %arg9: memref<1x128xf32, #tpu.memory_space<vmem>>, %arg10: memref<1x128xf32, #tpu.memory_space<vmem>>, %arg11: memref<1x128xf32, #tpu.memory_space<vmem>>, %arg12: memref<1x128xf32, #tpu.memory_space<vmem>>, %arg13: memref<16x128xf32, #tpu.memory_space<vmem>>, %arg14: memref<128x10xf32, #tpu.memory_space<vmem>>, %arg15: memref<1x10xf32, #tpu.memory_space<vmem>>, %arg16: memref<1x10xf32, #tpu.memory_space<vmem>>, %arg17: memref<1x10xf32, #tpu.memory_space<vmem>>, %arg18: memref<16x10xf32, #tpu.memory_space<vmem>>, %arg19: memref<8x16x128xbf16, #tpu.memory_space<vmem>>, %arg20: memref<8x16x128xbf16, #tpu.memory_space<vmem>>, %arg21: memref<16x128xf32, #tpu.memory_space<vmem>>, %arg22: memref<16x128xf32, #tpu.memory_space<vmem>>, %arg23: memref<16x128xbf16, #tpu.memory_space<vmem>>, %arg24: memref<16x128xf32, #tpu.memory_space<vmem>>) attributes {dimension_semantics = [#tpu.dimension_semantics<parallel>, #tpu.dimension_semantics<arbitrary>], iteration_bounds = array<i64: 1, 1>, scalar_prefetch = 0 : i64, scratch_operands = 5 : i64, tpu.core_type = #tpu.core_type<tc>, window_params = [{transform_indices = @transform_0, window_bounds = array<i64: 8, 16, 16>}, {pipeline_mode = #tpu.pipeline_mode<synchronous>, transform_indices = @transform_1, window_bounds = array<i64: 16, 128>}, {pipeline_mode = #tpu.pipeline_mode<synchronous>, transform_indices = @transform_2, window_bounds = array<i64: 1, 128>}, {pipeline_mode = #tpu.pipeline_mode<synchronous>, transform_indices = @transform_3, window_bounds = array<i64: 1, 128>}, {pipeline_mode = #tpu.pipeline_mode<synchronous>, transform_indices = @transform_4, window_bounds = array<i64: 1, 128>}, {pipeline_mode = #tpu.pipeline_mode<synchronous>, transform_indices = @transform_5, window_bounds = array<i64: 128, 128>}, {pipeline_mode = #tpu.pipeline_mode<synchronous>, transform_indices = @transform_6, window_bounds = array<i64: 1, 128>}, {pipeline_mode = #tpu.pipeline_mode<synchronous>, transform_indices = @transform_7, window_bounds = array<i64: 1, 128>}, {pipeline_mode = #tpu.pipeline_mode<synchronous>, transform_indices = @transform_8, window_bounds = array<i64: 1, 128>}, {pipeline_mode = #tpu.pipeline_mode<synchronous>, transform_indices = @transform_9, window_bounds = array<i64: 1, 128>}, {pipeline_mode = #tpu.pipeline_mode<synchronous>, transform_indices = @transform_10, window_bounds = array<i64: 1, 128>}, {transform_indices = @transform_11, window_bounds = array<i64: 16, 128>}, {pipeline_mode = #tpu.pipeline_mode<synchronous>, transform_indices = @transform_12, window_bounds = array<i64: 128, 10>}, {pipeline_mode = #tpu.pipeline_mode<synchronous>, transform_indices = @transform_13, window_bounds = array<i64: 1, 10>}, {pipeline_mode = #tpu.pipeline_mode<synchronous>, transform_indices = @transform_14, window_bounds = array<i64: 1, 10>}, {pipeline_mode = #tpu.pipeline_mode<synchronous>, transform_indices = @transform_15, window_bounds = array<i64: 1, 10>}, {transform_indices = @transform_16, window_bounds = array<i64: 16, 10>}, {transform_indices = @transform_17, window_bounds = array<i64: 8, 16, 128>}]} {
    %c0_i32 = arith.constant 0 : i32
    %0 = arith.cmpi eq, %arg1, %c0_i32 : i32
    %1 = arith.extui %0 : i1 to i32
    %c0_i32_0 = arith.constant 0 : i32
    %2 = arith.cmpi ne, %1, %c0_i32_0 : i32
    scf.if %2 {
      %c0_160 = arith.constant 0 : index
      %c0_161 = arith.constant 0 : index
      %460 = vector.load %arg13[%c0_160, %c0_161] : memref<16x128xf32, #tpu.memory_space<vmem>>, vector<16x128xf32>
      %c0_162 = arith.constant 0 : index
      %c0_163 = arith.constant 0 : index
      %461 = vector.load %arg21[%c0_162, %c0_163] : memref<16x128xf32, #tpu.memory_space<vmem>>, vector<16x128xf32>
      tpu.vector_store %arg21[%c0_162, %c0_163], %460 {strides = array<i32>} : memref<16x128xf32, #tpu.memory_space<vmem>>, vector<16x128xf32>,
      %cst_164 = arith.constant 0.000000e+00 : f32
      %462 = vector.broadcast %cst_164 : f32 to vector<16x128xf32>
      %c0_165 = arith.constant 0 : index
      %c0_166 = arith.constant 0 : index
      %463 = vector.load %arg22[%c0_165, %c0_166] : memref<16x128xf32, #tpu.memory_space<vmem>>, vector<16x128xf32>
      tpu.vector_store %arg22[%c0_165, %c0_166], %462 {strides = array<i32>} : memref<16x128xf32, #tpu.memory_space<vmem>>, vector<16x128xf32>,
      %cst_167 = arith.constant 0.000000e+00 : bf16
      %464 = vector.broadcast %cst_167 : bf16 to vector<16x128xbf16>
      %c0_168 = arith.constant 0 : index
      %c0_169 = arith.constant 0 : index
      %465 = vector.load %arg23[%c0_168, %c0_169] : memref<16x128xbf16, #tpu.memory_space<vmem>>, vector<16x128xbf16>
      tpu.vector_store %arg23[%c0_168, %c0_169], %464 {strides = array<i32>} : memref<16x128xbf16, #tpu.memory_space<vmem>>, vector<16x128xbf16>,
      %cst_170 = arith.constant 0.000000e+00 : f32
      %466 = vector.broadcast %cst_170 : f32 to vector<16x128xf32>
      %c0_171 = arith.constant 0 : index
      %c0_172 = arith.constant 0 : index
      %467 = vector.load %arg24[%c0_171, %c0_172] : memref<16x128xf32, #tpu.memory_space<vmem>>, vector<16x128xf32>
      tpu.vector_store %arg24[%c0_171, %c0_172], %466 {strides = array<i32>} : memref<16x128xf32, #tpu.memory_space<vmem>>, vector<16x128xf32>,
    } else {
    }
    %c0 = arith.constant 0 : index
    %c0_1 = arith.constant 0 : index
    %c0_2 = arith.constant 0 : index
    %3 = vector.load %arg2[%c0, %c0_1, %c0_2] : memref<8x16x16xbf16, #tpu.memory_space<vmem>>, vector<8x16x16xbf16>
    %4 = vector.shape_cast %3 : vector<8x16x16xbf16> to vector<128x16xbf16>
    %c0_3 = arith.constant 0 : index
    %c0_4 = arith.constant 0 : index
    %5 = vector.load %arg3[%c0_3, %c0_4] : memref<16x128xbf16, #tpu.memory_space<vmem>>, vector<16x128xbf16>
    %cst = arith.constant dense<0.000000e+00> : vector<128x128xf32>
    %6 = tpu.matmul %4, %5, %cst {dimension_numbers = #tpu.dot_dimension_numbers<[1], [0], [0], [1], [0, 0, 1, 1], [], []>} : vector<128x16xbf16>, vector<16x128xbf16>, vector<128x128xf32> -> vector<128x128xf32>
    %c0_5 = arith.constant 0 : index
    %c0_6 = arith.constant 0 : index
    %7 = vector.load %arg4[%c0_5, %c0_6] : memref<1x128xf32, #tpu.memory_space<vmem>>, vector<1x128xf32>
    %8 = vector.broadcast %7 : vector<1x128xf32> to vector<128x128xf32>
    %9 = arith.addf %6, %8 : vector<128x128xf32>
    %c0_7 = arith.constant 0 : index
    %c0_8 = arith.constant 0 : index
    %10 = vector.load %arg5[%c0_7, %c0_8] : memref<1x128xf32, #tpu.memory_space<vmem>>, vector<1x128xf32>
    %c0_9 = arith.constant 0 : index
    %c0_10 = arith.constant 0 : index
    %11 = vector.load %arg6[%c0_9, %c0_10] : memref<1x128xf32, #tpu.memory_space<vmem>>, vector<1x128xf32>
    %cst_11 = arith.constant dense<0.000000e+00> : vector<128xf32>
    %12 = vector.multi_reduction <add>, %9, %cst_11 [1] : vector<128x128xf32> to vector<128xf32>
    %13 = vector.shape_cast %12 : vector<128xf32> to vector<128x1xf32>
    %14 = arith.mulf %9, %9 : vector<128x128xf32>
    %cst_12 = arith.constant dense<0.000000e+00> : vector<128xf32>
    %15 = vector.multi_reduction <add>, %14, %cst_12 [1] : vector<128x128xf32> to vector<128xf32>
    %16 = vector.shape_cast %15 : vector<128xf32> to vector<128x1xf32>
    %cst_13 = arith.constant 3.125000e-02 : f32
    %17 = vector.broadcast %cst_13 : f32 to vector<128x1xf32>
    %18 = arith.mulf %13, %17 : vector<128x1xf32>
    %cst_14 = arith.constant 3.125000e-02 : f32
    %19 = vector.broadcast %cst_14 : f32 to vector<128x1xf32>
    %20 = arith.mulf %16, %19 : vector<128x1xf32>
    %21 = arith.mulf %18, %18 : vector<128x1xf32>
    %22 = arith.subf %20, %21 : vector<128x1xf32>
    %cst_15 = arith.constant 0.000000e+00 : f32
    %23 = vector.broadcast %cst_15 : f32 to vector<128x1xf32>
    %24 = arith.maximumf %22, %23 : vector<128x1xf32>
    %25 = vector.broadcast %18 : vector<128x1xf32> to vector<128x128xf32>
    %26 = arith.subf %9, %25 : vector<128x128xf32>
    %cst_16 = arith.constant 9.99999974E-6 : f32
    %27 = vector.broadcast %cst_16 : f32 to vector<128x1xf32>
    %28 = arith.addf %24, %27 : vector<128x1xf32>
    %29 = math.rsqrt %28 : vector<128x1xf32>
    %30 = vector.broadcast %29 : vector<128x1xf32> to vector<128x128xf32>
    %31 = arith.mulf %26, %30 : vector<128x128xf32>
    %32 = vector.broadcast %10 : vector<1x128xf32> to vector<128x128xf32>
    %33 = arith.mulf %31, %32 : vector<128x128xf32>
    %34 = vector.broadcast %11 : vector<1x128xf32> to vector<128x128xf32>
    %35 = arith.addf %33, %34 : vector<128x128xf32>
    %36 = vector.shape_cast %35 : vector<128x128xf32> to vector<8x16x128xf32>
    %37 = arith.truncf %36 : vector<8x16x128xf32> to vector<8x16x128xbf16>
    %c0_17 = arith.constant 0 : index
    %c0_18 = arith.constant 0 : index
    %c0_19 = arith.constant 0 : index
    %38 = vector.load %arg20[%c0_17, %c0_18, %c0_19] : memref<8x16x128xbf16, #tpu.memory_space<vmem>>, vector<8x16x128xbf16>
    tpu.vector_store %arg20[%c0_17, %c0_18, %c0_19], %37 {strides = array<i32>} : memref<8x16x128xbf16, #tpu.memory_space<vmem>>, vector<8x16x128xbf16>,
    %c0_20 = arith.constant 0 : index
    %c0_21 = arith.constant 0 : index
    %39 = vector.load %arg7[%c0_20, %c0_21] : memref<128x128xbf16, #tpu.memory_space<vmem>>, vector<128x128xbf16>
    %c0_22 = arith.constant 0 : index
    %c0_23 = arith.constant 0 : index
    %40 = vector.load %arg8[%c0_22, %c0_23] : memref<1x128xf32, #tpu.memory_space<vmem>>, vector<1x128xf32>
    %41 = vector.shape_cast %40 : vector<1x128xf32> to vector<1x128xf32>
    %42 = vector.broadcast %41 : vector<1x128xf32> to vector<16x128xf32>
    %c0_24 = arith.constant 0 : index
    %c0_25 = arith.constant 0 : index
    %43 = vector.load %arg9[%c0_24, %c0_25] : memref<1x128xf32, #tpu.memory_space<vmem>>, vector<1x128xf32>
    %44 = vector.shape_cast %43 : vector<1x128xf32> to vector<1x128xf32>
    %45 = vector.broadcast %44 : vector<1x128xf32> to vector<16x128xf32>
    %c0_26 = arith.constant 0 : index
    %c0_27 = arith.constant 0 : index
    %46 = vector.load %arg10[%c0_26, %c0_27] : memref<1x128xf32, #tpu.memory_space<vmem>>, vector<1x128xf32>
    %47 = vector.shape_cast %46 : vector<1x128xf32> to vector<1x128xf32>
    %48 = vector.broadcast %47 : vector<1x128xf32> to vector<16x128xf32>
    %c0_28 = arith.constant 0 : index
    %c0_29 = arith.constant 0 : index
    %49 = vector.load %arg11[%c0_28, %c0_29] : memref<1x128xf32, #tpu.memory_space<vmem>>, vector<1x128xf32>
    %cst_30 = arith.constant 0.00999999977 : f32
    %50 = vector.broadcast %cst_30 : f32 to vector<1x128xf32>
    %51 = arith.maximumf %49, %50 : vector<1x128xf32>
    %cst_31 = arith.constant -1.000000e+00 : f32
    %52 = vector.broadcast %cst_31 : f32 to vector<1x128xf32>
    %53 = arith.divf %52, %51 : vector<1x128xf32>
    %54 = math.exp %53 : vector<1x128xf32>
    %c0_32 = arith.constant 0 : index
    %c0_33 = arith.constant 0 : index
    %55 = vector.load %arg12[%c0_32, %c0_33] : memref<1x128xf32, #tpu.memory_space<vmem>>, vector<1x128xf32>
    %56 = arith.negf %55 : vector<1x128xf32>
    %57 = math.exp %56 : vector<1x128xf32>
    %cst_34 = arith.constant 1.000000e+00 : f32
    %58 = vector.broadcast %cst_34 : f32 to vector<1x128xf32>
    %59 = arith.addf %58, %57 : vector<1x128xf32>
    %60 = arith.divf %58, %59 : vector<1x128xf32>
    %61 = vector.shape_cast %54 : vector<1x128xf32> to vector<1x128xf32>
    %62 = vector.broadcast %61 : vector<1x128xf32> to vector<16x128xf32>
    %cst_35 = arith.constant 1.000000e+00 : f32
    %63 = vector.broadcast %cst_35 : f32 to vector<1x128xf32>
    %64 = arith.subf %63, %54 : vector<1x128xf32>
    %65 = vector.shape_cast %64 : vector<1x128xf32> to vector<1x128xf32>
    %66 = vector.broadcast %65 : vector<1x128xf32> to vector<16x128xf32>
    %67 = vector.shape_cast %60 : vector<1x128xf32> to vector<1x128xf32>
    %68 = vector.broadcast %67 : vector<1x128xf32> to vector<16x128xf32>
    %cst_36 = arith.constant 1.000000e+00 : f32
    %69 = vector.broadcast %cst_36 : f32 to vector<1x128xf32>
    %70 = arith.subf %69, %60 : vector<1x128xf32>
    %71 = vector.shape_cast %70 : vector<1x128xf32> to vector<1x128xf32>
    %72 = vector.broadcast %71 : vector<1x128xf32> to vector<16x128xf32>
    %c0_37 = arith.constant 0 : index
    %c0_38 = arith.constant 0 : index
    %73 = vector.load %arg21[%c0_37, %c0_38] : memref<16x128xf32, #tpu.memory_space<vmem>>, vector<16x128xf32>
    %c0_39 = arith.constant 0 : index
    %c0_40 = arith.constant 0 : index
    %74 = vector.load %arg22[%c0_39, %c0_40] : memref<16x128xf32, #tpu.memory_space<vmem>>, vector<16x128xf32>
    %c0_41 = arith.constant 0 : index
    %c0_42 = arith.constant 0 : index
    %75 = vector.load %arg23[%c0_41, %c0_42] : memref<16x128xbf16, #tpu.memory_space<vmem>>, vector<16x128xbf16>
    %c0_43 = arith.constant 0 : index
    %c0_44 = arith.constant 0 : index
    %76 = vector.load %arg24[%c0_43, %c0_44] : memref<16x128xf32, #tpu.memory_space<vmem>>, vector<16x128xf32>
    %c0_i32_45 = arith.constant 0 : i32
    %77 = arith.index_cast %c0_i32_45 : i32 to index
    %c0_46 = arith.constant 0 : index
    %c0_47 = arith.constant 0 : index
    %78 = vector.load %arg20[%77, %c0_46, %c0_47] : memref<8x16x128xbf16, #tpu.memory_space<vmem>>, vector<1x16x128xbf16>
    %79 = vector.shape_cast %78 : vector<1x16x128xbf16> to vector<16x128xbf16>
    %80 = arith.extf %79 : vector<16x128xbf16> to vector<16x128xf32>
    %cst_48 = arith.constant dense<0.000000e+00> : vector<16x128xf32>
    %81 = tpu.matmul %75, %39, %cst_48 {dimension_numbers = #tpu.dot_dimension_numbers<[1], [0], [0], [1], [0, 0, 1, 1], [], []>} : vector<16x128xbf16>, vector<128x128xbf16>, vector<16x128xf32> -> vector<16x128xf32>
    %82 = arith.addf %81, %42 : vector<16x128xf32>
    %cst_49 = arith.constant dense<0.000000e+00> : vector<16xf32>
    %83 = vector.multi_reduction <add>, %82, %cst_49 [1] : vector<16x128xf32> to vector<16xf32>
    %84 = vector.shape_cast %83 : vector<16xf32> to vector<16x1xf32>
    %85 = arith.mulf %82, %82 : vector<16x128xf32>
    %cst_50 = arith.constant dense<0.000000e+00> : vector<16xf32>
    %86 = vector.multi_reduction <add>, %85, %cst_50 [1] : vector<16x128xf32> to vector<16xf32>
    %87 = vector.shape_cast %86 : vector<16xf32> to vector<16x1xf32>
    %cst_51 = arith.constant 3.125000e-02 : f32
    %88 = vector.broadcast %cst_51 : f32 to vector<16x1xf32>
    %89 = arith.mulf %84, %88 : vector<16x1xf32>
    %cst_52 = arith.constant 3.125000e-02 : f32
    %90 = vector.broadcast %cst_52 : f32 to vector<16x1xf32>
    %91 = arith.mulf %87, %90 : vector<16x1xf32>
    %92 = arith.mulf %89, %89 : vector<16x1xf32>
    %93 = arith.subf %91, %92 : vector<16x1xf32>
    %cst_53 = arith.constant 0.000000e+00 : f32
    %94 = vector.broadcast %cst_53 : f32 to vector<16x1xf32>
    %95 = arith.maximumf %93, %94 : vector<16x1xf32>
    %96 = vector.broadcast %89 : vector<16x1xf32> to vector<16x128xf32>
    %97 = arith.subf %82, %96 : vector<16x128xf32>
    %cst_54 = arith.constant 9.99999974E-6 : f32
    %98 = vector.broadcast %cst_54 : f32 to vector<16x1xf32>
    %99 = arith.addf %95, %98 : vector<16x1xf32>
    %100 = math.rsqrt %99 : vector<16x1xf32>
    %101 = vector.broadcast %100 : vector<16x1xf32> to vector<16x128xf32>
    %102 = arith.mulf %97, %101 : vector<16x128xf32>
    %103 = arith.mulf %102, %45 : vector<16x128xf32>
    %104 = arith.addf %103, %48 : vector<16x128xf32>
    %105 = arith.addf %80, %104 : vector<16x128xf32>
    %106 = arith.mulf %68, %74 : vector<16x128xf32>
    %107 = arith.mulf %72, %105 : vector<16x128xf32>
    %108 = arith.addf %106, %107 : vector<16x128xf32>
    %109 = arith.mulf %62, %73 : vector<16x128xf32>
    %110 = arith.mulf %66, %108 : vector<16x128xf32>
    %111 = arith.addf %109, %110 : vector<16x128xf32>
    %cst_55 = arith.constant 5.000000e-01 : f32
    %112 = vector.broadcast %cst_55 : f32 to vector<16x128xf32>
    %113 = arith.subf %111, %112 : vector<16x128xf32>
    %cst_56 = arith.constant 0.000000e+00 : f32
    %114 = vector.broadcast %cst_56 : f32 to vector<16x128xf32>
    %115 = arith.cmpf ogt, %113, %114 : vector<16x128xf32>
    %116 = arith.extui %115 : vector<16x128xi1> to vector<16x128xi32>
    %117 = arith.sitofp %116 : vector<16x128xi32> to vector<16x128xf32>
    %118 = arith.truncf %117 : vector<16x128xf32> to vector<16x128xbf16>
    %119 = arith.index_cast %c0_i32_45 : i32 to index
    %c0_57 = arith.constant 0 : index
    %c0_58 = arith.constant 0 : index
    %120 = vector.load %arg19[%119, %c0_57, %c0_58] : memref<8x16x128xbf16, #tpu.memory_space<vmem>>, vector<1x16x128xbf16>
    %121 = vector.shape_cast %120 : vector<1x16x128xbf16> to vector<16x128xbf16>
    %122 = vector.shape_cast %118 : vector<16x128xbf16> to vector<1x16x128xbf16>
    tpu.vector_store %arg19[%119, %c0_57, %c0_58], %122 {strides = array<i32>} : memref<8x16x128xbf16, #tpu.memory_space<vmem>>, vector<1x16x128xbf16>,
    %123 = arith.addf %76, %117 : vector<16x128xf32>
    %c1_i32 = arith.constant 1 : i32
    %124 = arith.index_cast %c1_i32 : i32 to index
    %c0_59 = arith.constant 0 : index
    %c0_60 = arith.constant 0 : index
    %125 = vector.load %arg20[%124, %c0_59, %c0_60] : memref<8x16x128xbf16, #tpu.memory_space<vmem>>, vector<1x16x128xbf16>
    %126 = vector.shape_cast %125 : vector<1x16x128xbf16> to vector<16x128xbf16>
    %127 = arith.extf %126 : vector<16x128xbf16> to vector<16x128xf32>
    %cst_61 = arith.constant dense<0.000000e+00> : vector<16x128xf32>
    %128 = tpu.matmul %118, %39, %cst_61 {dimension_numbers = #tpu.dot_dimension_numbers<[1], [0], [0], [1], [0, 0, 1, 1], [], []>} : vector<16x128xbf16>, vector<128x128xbf16>, vector<16x128xf32> -> vector<16x128xf32>
    %129 = arith.addf %128, %42 : vector<16x128xf32>
    %cst_62 = arith.constant dense<0.000000e+00> : vector<16xf32>
    %130 = vector.multi_reduction <add>, %129, %cst_62 [1] : vector<16x128xf32> to vector<16xf32>
    %131 = vector.shape_cast %130 : vector<16xf32> to vector<16x1xf32>
    %132 = arith.mulf %129, %129 : vector<16x128xf32>
    %cst_63 = arith.constant dense<0.000000e+00> : vector<16xf32>
    %133 = vector.multi_reduction <add>, %132, %cst_63 [1] : vector<16x128xf32> to vector<16xf32>
    %134 = vector.shape_cast %133 : vector<16xf32> to vector<16x1xf32>
    %cst_64 = arith.constant 3.125000e-02 : f32
    %135 = vector.broadcast %cst_64 : f32 to vector<16x1xf32>
    %136 = arith.mulf %131, %135 : vector<16x1xf32>
    %cst_65 = arith.constant 3.125000e-02 : f32
    %137 = vector.broadcast %cst_65 : f32 to vector<16x1xf32>
    %138 = arith.mulf %134, %137 : vector<16x1xf32>
    %139 = arith.mulf %136, %136 : vector<16x1xf32>
    %140 = arith.subf %138, %139 : vector<16x1xf32>
    %cst_66 = arith.constant 0.000000e+00 : f32
    %141 = vector.broadcast %cst_66 : f32 to vector<16x1xf32>
    %142 = arith.maximumf %140, %141 : vector<16x1xf32>
    %143 = vector.broadcast %136 : vector<16x1xf32> to vector<16x128xf32>
    %144 = arith.subf %129, %143 : vector<16x128xf32>
    %cst_67 = arith.constant 9.99999974E-6 : f32
    %145 = vector.broadcast %cst_67 : f32 to vector<16x1xf32>
    %146 = arith.addf %142, %145 : vector<16x1xf32>
    %147 = math.rsqrt %146 : vector<16x1xf32>
    %148 = vector.broadcast %147 : vector<16x1xf32> to vector<16x128xf32>
    %149 = arith.mulf %144, %148 : vector<16x128xf32>
    %150 = arith.mulf %149, %45 : vector<16x128xf32>
    %151 = arith.addf %150, %48 : vector<16x128xf32>
    %152 = arith.addf %127, %151 : vector<16x128xf32>
    %153 = arith.mulf %68, %108 : vector<16x128xf32>
    %154 = arith.mulf %72, %152 : vector<16x128xf32>
    %155 = arith.addf %153, %154 : vector<16x128xf32>
    %156 = arith.mulf %62, %111 : vector<16x128xf32>
    %157 = arith.mulf %66, %155 : vector<16x128xf32>
    %158 = arith.addf %156, %157 : vector<16x128xf32>
    %cst_68 = arith.constant 5.000000e-01 : f32
    %159 = vector.broadcast %cst_68 : f32 to vector<16x128xf32>
    %160 = arith.subf %158, %159 : vector<16x128xf32>
    %cst_69 = arith.constant 0.000000e+00 : f32
    %161 = vector.broadcast %cst_69 : f32 to vector<16x128xf32>
    %162 = arith.cmpf ogt, %160, %161 : vector<16x128xf32>
    %163 = arith.extui %162 : vector<16x128xi1> to vector<16x128xi32>
    %164 = arith.sitofp %163 : vector<16x128xi32> to vector<16x128xf32>
    %165 = arith.truncf %164 : vector<16x128xf32> to vector<16x128xbf16>
    %166 = arith.index_cast %c1_i32 : i32 to index
    %c0_70 = arith.constant 0 : index
    %c0_71 = arith.constant 0 : index
    %167 = vector.load %arg19[%166, %c0_70, %c0_71] : memref<8x16x128xbf16, #tpu.memory_space<vmem>>, vector<1x16x128xbf16>
    %168 = vector.shape_cast %167 : vector<1x16x128xbf16> to vector<16x128xbf16>
    %169 = vector.shape_cast %165 : vector<16x128xbf16> to vector<1x16x128xbf16>
    tpu.vector_store %arg19[%166, %c0_70, %c0_71], %169 {strides = array<i32>} : memref<8x16x128xbf16, #tpu.memory_space<vmem>>, vector<1x16x128xbf16>,
    %170 = arith.addf %123, %164 : vector<16x128xf32>
    %c2_i32 = arith.constant 2 : i32
    %171 = arith.index_cast %c2_i32 : i32 to index
    %c0_72 = arith.constant 0 : index
    %c0_73 = arith.constant 0 : index
    %172 = vector.load %arg20[%171, %c0_72, %c0_73] : memref<8x16x128xbf16, #tpu.memory_space<vmem>>, vector<1x16x128xbf16>
    %173 = vector.shape_cast %172 : vector<1x16x128xbf16> to vector<16x128xbf16>
    %174 = arith.extf %173 : vector<16x128xbf16> to vector<16x128xf32>
    %cst_74 = arith.constant dense<0.000000e+00> : vector<16x128xf32>
    %175 = tpu.matmul %165, %39, %cst_74 {dimension_numbers = #tpu.dot_dimension_numbers<[1], [0], [0], [1], [0, 0, 1, 1], [], []>} : vector<16x128xbf16>, vector<128x128xbf16>, vector<16x128xf32> -> vector<16x128xf32>
    %176 = arith.addf %175, %42 : vector<16x128xf32>
    %cst_75 = arith.constant dense<0.000000e+00> : vector<16xf32>
    %177 = vector.multi_reduction <add>, %176, %cst_75 [1] : vector<16x128xf32> to vector<16xf32>
    %178 = vector.shape_cast %177 : vector<16xf32> to vector<16x1xf32>
    %179 = arith.mulf %176, %176 : vector<16x128xf32>
    %cst_76 = arith.constant dense<0.000000e+00> : vector<16xf32>
    %180 = vector.multi_reduction <add>, %179, %cst_76 [1] : vector<16x128xf32> to vector<16xf32>
    %181 = vector.shape_cast %180 : vector<16xf32> to vector<16x1xf32>
    %cst_77 = arith.constant 3.125000e-02 : f32
    %182 = vector.broadcast %cst_77 : f32 to vector<16x1xf32>
    %183 = arith.mulf %178, %182 : vector<16x1xf32>
    %cst_78 = arith.constant 3.125000e-02 : f32
    %184 = vector.broadcast %cst_78 : f32 to vector<16x1xf32>
    %185 = arith.mulf %181, %184 : vector<16x1xf32>
    %186 = arith.mulf %183, %183 : vector<16x1xf32>
    %187 = arith.subf %185, %186 : vector<16x1xf32>
    %cst_79 = arith.constant 0.000000e+00 : f32
    %188 = vector.broadcast %cst_79 : f32 to vector<16x1xf32>
    %189 = arith.maximumf %187, %188 : vector<16x1xf32>
    %190 = vector.broadcast %183 : vector<16x1xf32> to vector<16x128xf32>
    %191 = arith.subf %176, %190 : vector<16x128xf32>
    %cst_80 = arith.constant 9.99999974E-6 : f32
    %192 = vector.broadcast %cst_80 : f32 to vector<16x1xf32>
    %193 = arith.addf %189, %192 : vector<16x1xf32>
    %194 = math.rsqrt %193 : vector<16x1xf32>
    %195 = vector.broadcast %194 : vector<16x1xf32> to vector<16x128xf32>
    %196 = arith.mulf %191, %195 : vector<16x128xf32>
    %197 = arith.mulf %196, %45 : vector<16x128xf32>
    %198 = arith.addf %197, %48 : vector<16x128xf32>
    %199 = arith.addf %174, %198 : vector<16x128xf32>
    %200 = arith.mulf %68, %155 : vector<16x128xf32>
    %201 = arith.mulf %72, %199 : vector<16x128xf32>
    %202 = arith.addf %200, %201 : vector<16x128xf32>
    %203 = arith.mulf %62, %158 : vector<16x128xf32>
    %204 = arith.mulf %66, %202 : vector<16x128xf32>
    %205 = arith.addf %203, %204 : vector<16x128xf32>
    %cst_81 = arith.constant 5.000000e-01 : f32
    %206 = vector.broadcast %cst_81 : f32 to vector<16x128xf32>
    %207 = arith.subf %205, %206 : vector<16x128xf32>
    %cst_82 = arith.constant 0.000000e+00 : f32
    %208 = vector.broadcast %cst_82 : f32 to vector<16x128xf32>
    %209 = arith.cmpf ogt, %207, %208 : vector<16x128xf32>
    %210 = arith.extui %209 : vector<16x128xi1> to vector<16x128xi32>
    %211 = arith.sitofp %210 : vector<16x128xi32> to vector<16x128xf32>
    %212 = arith.truncf %211 : vector<16x128xf32> to vector<16x128xbf16>
    %213 = arith.index_cast %c2_i32 : i32 to index
    %c0_83 = arith.constant 0 : index
    %c0_84 = arith.constant 0 : index
    %214 = vector.load %arg19[%213, %c0_83, %c0_84] : memref<8x16x128xbf16, #tpu.memory_space<vmem>>, vector<1x16x128xbf16>
    %215 = vector.shape_cast %214 : vector<1x16x128xbf16> to vector<16x128xbf16>
    %216 = vector.shape_cast %212 : vector<16x128xbf16> to vector<1x16x128xbf16>
    tpu.vector_store %arg19[%213, %c0_83, %c0_84], %216 {strides = array<i32>} : memref<8x16x128xbf16, #tpu.memory_space<vmem>>, vector<1x16x128xbf16>,
    %217 = arith.addf %170, %211 : vector<16x128xf32>
    %c3_i32 = arith.constant 3 : i32
    %218 = arith.index_cast %c3_i32 : i32 to index
    %c0_85 = arith.constant 0 : index
    %c0_86 = arith.constant 0 : index
    %219 = vector.load %arg20[%218, %c0_85, %c0_86] : memref<8x16x128xbf16, #tpu.memory_space<vmem>>, vector<1x16x128xbf16>
    %220 = vector.shape_cast %219 : vector<1x16x128xbf16> to vector<16x128xbf16>
    %221 = arith.extf %220 : vector<16x128xbf16> to vector<16x128xf32>
    %cst_87 = arith.constant dense<0.000000e+00> : vector<16x128xf32>
    %222 = tpu.matmul %212, %39, %cst_87 {dimension_numbers = #tpu.dot_dimension_numbers<[1], [0], [0], [1], [0, 0, 1, 1], [], []>} : vector<16x128xbf16>, vector<128x128xbf16>, vector<16x128xf32> -> vector<16x128xf32>
    %223 = arith.addf %222, %42 : vector<16x128xf32>
    %cst_88 = arith.constant dense<0.000000e+00> : vector<16xf32>
    %224 = vector.multi_reduction <add>, %223, %cst_88 [1] : vector<16x128xf32> to vector<16xf32>
    %225 = vector.shape_cast %224 : vector<16xf32> to vector<16x1xf32>
    %226 = arith.mulf %223, %223 : vector<16x128xf32>
    %cst_89 = arith.constant dense<0.000000e+00> : vector<16xf32>
    %227 = vector.multi_reduction <add>, %226, %cst_89 [1] : vector<16x128xf32> to vector<16xf32>
    %228 = vector.shape_cast %227 : vector<16xf32> to vector<16x1xf32>
    %cst_90 = arith.constant 3.125000e-02 : f32
    %229 = vector.broadcast %cst_90 : f32 to vector<16x1xf32>
    %230 = arith.mulf %225, %229 : vector<16x1xf32>
    %cst_91 = arith.constant 3.125000e-02 : f32
    %231 = vector.broadcast %cst_91 : f32 to vector<16x1xf32>
    %232 = arith.mulf %228, %231 : vector<16x1xf32>
    %233 = arith.mulf %230, %230 : vector<16x1xf32>
    %234 = arith.subf %232, %233 : vector<16x1xf32>
    %cst_92 = arith.constant 0.000000e+00 : f32
    %235 = vector.broadcast %cst_92 : f32 to vector<16x1xf32>
    %236 = arith.maximumf %234, %235 : vector<16x1xf32>
    %237 = vector.broadcast %230 : vector<16x1xf32> to vector<16x128xf32>
    %238 = arith.subf %223, %237 : vector<16x128xf32>
    %cst_93 = arith.constant 9.99999974E-6 : f32
    %239 = vector.broadcast %cst_93 : f32 to vector<16x1xf32>
    %240 = arith.addf %236, %239 : vector<16x1xf32>
    %241 = math.rsqrt %240 : vector<16x1xf32>
    %242 = vector.broadcast %241 : vector<16x1xf32> to vector<16x128xf32>
    %243 = arith.mulf %238, %242 : vector<16x128xf32>
    %244 = arith.mulf %243, %45 : vector<16x128xf32>
    %245 = arith.addf %244, %48 : vector<16x128xf32>
    %246 = arith.addf %221, %245 : vector<16x128xf32>
    %247 = arith.mulf %68, %202 : vector<16x128xf32>
    %248 = arith.mulf %72, %246 : vector<16x128xf32>
    %249 = arith.addf %247, %248 : vector<16x128xf32>
    %250 = arith.mulf %62, %205 : vector<16x128xf32>
    %251 = arith.mulf %66, %249 : vector<16x128xf32>
    %252 = arith.addf %250, %251 : vector<16x128xf32>
    %cst_94 = arith.constant 5.000000e-01 : f32
    %253 = vector.broadcast %cst_94 : f32 to vector<16x128xf32>
    %254 = arith.subf %252, %253 : vector<16x128xf32>
    %cst_95 = arith.constant 0.000000e+00 : f32
    %255 = vector.broadcast %cst_95 : f32 to vector<16x128xf32>
    %256 = arith.cmpf ogt, %254, %255 : vector<16x128xf32>
    %257 = arith.extui %256 : vector<16x128xi1> to vector<16x128xi32>
    %258 = arith.sitofp %257 : vector<16x128xi32> to vector<16x128xf32>
    %259 = arith.truncf %258 : vector<16x128xf32> to vector<16x128xbf16>
    %260 = arith.index_cast %c3_i32 : i32 to index
    %c0_96 = arith.constant 0 : index
    %c0_97 = arith.constant 0 : index
    %261 = vector.load %arg19[%260, %c0_96, %c0_97] : memref<8x16x128xbf16, #tpu.memory_space<vmem>>, vector<1x16x128xbf16>
    %262 = vector.shape_cast %261 : vector<1x16x128xbf16> to vector<16x128xbf16>
    %263 = vector.shape_cast %259 : vector<16x128xbf16> to vector<1x16x128xbf16>
    tpu.vector_store %arg19[%260, %c0_96, %c0_97], %263 {strides = array<i32>} : memref<8x16x128xbf16, #tpu.memory_space<vmem>>, vector<1x16x128xbf16>,
    %264 = arith.addf %217, %258 : vector<16x128xf32>
    %c4_i32 = arith.constant 4 : i32
    %265 = arith.index_cast %c4_i32 : i32 to index
    %c0_98 = arith.constant 0 : index
    %c0_99 = arith.constant 0 : index
    %266 = vector.load %arg20[%265, %c0_98, %c0_99] : memref<8x16x128xbf16, #tpu.memory_space<vmem>>, vector<1x16x128xbf16>
    %267 = vector.shape_cast %266 : vector<1x16x128xbf16> to vector<16x128xbf16>
    %268 = arith.extf %267 : vector<16x128xbf16> to vector<16x128xf32>
    %cst_100 = arith.constant dense<0.000000e+00> : vector<16x128xf32>
    %269 = tpu.matmul %259, %39, %cst_100 {dimension_numbers = #tpu.dot_dimension_numbers<[1], [0], [0], [1], [0, 0, 1, 1], [], []>} : vector<16x128xbf16>, vector<128x128xbf16>, vector<16x128xf32> -> vector<16x128xf32>
    %270 = arith.addf %269, %42 : vector<16x128xf32>
    %cst_101 = arith.constant dense<0.000000e+00> : vector<16xf32>
    %271 = vector.multi_reduction <add>, %270, %cst_101 [1] : vector<16x128xf32> to vector<16xf32>
    %272 = vector.shape_cast %271 : vector<16xf32> to vector<16x1xf32>
    %273 = arith.mulf %270, %270 : vector<16x128xf32>
    %cst_102 = arith.constant dense<0.000000e+00> : vector<16xf32>
    %274 = vector.multi_reduction <add>, %273, %cst_102 [1] : vector<16x128xf32> to vector<16xf32>
    %275 = vector.shape_cast %274 : vector<16xf32> to vector<16x1xf32>
    %cst_103 = arith.constant 3.125000e-02 : f32
    %276 = vector.broadcast %cst_103 : f32 to vector<16x1xf32>
    %277 = arith.mulf %272, %276 : vector<16x1xf32>
    %cst_104 = arith.constant 3.125000e-02 : f32
    %278 = vector.broadcast %cst_104 : f32 to vector<16x1xf32>
    %279 = arith.mulf %275, %278 : vector<16x1xf32>
    %280 = arith.mulf %277, %277 : vector<16x1xf32>
    %281 = arith.subf %279, %280 : vector<16x1xf32>
    %cst_105 = arith.constant 0.000000e+00 : f32
    %282 = vector.broadcast %cst_105 : f32 to vector<16x1xf32>
    %283 = arith.maximumf %281, %282 : vector<16x1xf32>
    %284 = vector.broadcast %277 : vector<16x1xf32> to vector<16x128xf32>
    %285 = arith.subf %270, %284 : vector<16x128xf32>
    %cst_106 = arith.constant 9.99999974E-6 : f32
    %286 = vector.broadcast %cst_106 : f32 to vector<16x1xf32>
    %287 = arith.addf %283, %286 : vector<16x1xf32>
    %288 = math.rsqrt %287 : vector<16x1xf32>
    %289 = vector.broadcast %288 : vector<16x1xf32> to vector<16x128xf32>
    %290 = arith.mulf %285, %289 : vector<16x128xf32>
    %291 = arith.mulf %290, %45 : vector<16x128xf32>
    %292 = arith.addf %291, %48 : vector<16x128xf32>
    %293 = arith.addf %268, %292 : vector<16x128xf32>
    %294 = arith.mulf %68, %249 : vector<16x128xf32>
    %295 = arith.mulf %72, %293 : vector<16x128xf32>
    %296 = arith.addf %294, %295 : vector<16x128xf32>
    %297 = arith.mulf %62, %252 : vector<16x128xf32>
    %298 = arith.mulf %66, %296 : vector<16x128xf32>
    %299 = arith.addf %297, %298 : vector<16x128xf32>
    %cst_107 = arith.constant 5.000000e-01 : f32
    %300 = vector.broadcast %cst_107 : f32 to vector<16x128xf32>
    %301 = arith.subf %299, %300 : vector<16x128xf32>
    %cst_108 = arith.constant 0.000000e+00 : f32
    %302 = vector.broadcast %cst_108 : f32 to vector<16x128xf32>
    %303 = arith.cmpf ogt, %301, %302 : vector<16x128xf32>
    %304 = arith.extui %303 : vector<16x128xi1> to vector<16x128xi32>
    %305 = arith.sitofp %304 : vector<16x128xi32> to vector<16x128xf32>
    %306 = arith.truncf %305 : vector<16x128xf32> to vector<16x128xbf16>
    %307 = arith.index_cast %c4_i32 : i32 to index
    %c0_109 = arith.constant 0 : index
    %c0_110 = arith.constant 0 : index
    %308 = vector.load %arg19[%307, %c0_109, %c0_110] : memref<8x16x128xbf16, #tpu.memory_space<vmem>>, vector<1x16x128xbf16>
    %309 = vector.shape_cast %308 : vector<1x16x128xbf16> to vector<16x128xbf16>
    %310 = vector.shape_cast %306 : vector<16x128xbf16> to vector<1x16x128xbf16>
    tpu.vector_store %arg19[%307, %c0_109, %c0_110], %310 {strides = array<i32>} : memref<8x16x128xbf16, #tpu.memory_space<vmem>>, vector<1x16x128xbf16>,
    %311 = arith.addf %264, %305 : vector<16x128xf32>
    %c5_i32 = arith.constant 5 : i32
    %312 = arith.index_cast %c5_i32 : i32 to index
    %c0_111 = arith.constant 0 : index
    %c0_112 = arith.constant 0 : index
    %313 = vector.load %arg20[%312, %c0_111, %c0_112] : memref<8x16x128xbf16, #tpu.memory_space<vmem>>, vector<1x16x128xbf16>
    %314 = vector.shape_cast %313 : vector<1x16x128xbf16> to vector<16x128xbf16>
    %315 = arith.extf %314 : vector<16x128xbf16> to vector<16x128xf32>
    %cst_113 = arith.constant dense<0.000000e+00> : vector<16x128xf32>
    %316 = tpu.matmul %306, %39, %cst_113 {dimension_numbers = #tpu.dot_dimension_numbers<[1], [0], [0], [1], [0, 0, 1, 1], [], []>} : vector<16x128xbf16>, vector<128x128xbf16>, vector<16x128xf32> -> vector<16x128xf32>
    %317 = arith.addf %316, %42 : vector<16x128xf32>
    %cst_114 = arith.constant dense<0.000000e+00> : vector<16xf32>
    %318 = vector.multi_reduction <add>, %317, %cst_114 [1] : vector<16x128xf32> to vector<16xf32>
    %319 = vector.shape_cast %318 : vector<16xf32> to vector<16x1xf32>
    %320 = arith.mulf %317, %317 : vector<16x128xf32>
    %cst_115 = arith.constant dense<0.000000e+00> : vector<16xf32>
    %321 = vector.multi_reduction <add>, %320, %cst_115 [1] : vector<16x128xf32> to vector<16xf32>
    %322 = vector.shape_cast %321 : vector<16xf32> to vector<16x1xf32>
    %cst_116 = arith.constant 3.125000e-02 : f32
    %323 = vector.broadcast %cst_116 : f32 to vector<16x1xf32>
    %324 = arith.mulf %319, %323 : vector<16x1xf32>
    %cst_117 = arith.constant 3.125000e-02 : f32
    %325 = vector.broadcast %cst_117 : f32 to vector<16x1xf32>
    %326 = arith.mulf %322, %325 : vector<16x1xf32>
    %327 = arith.mulf %324, %324 : vector<16x1xf32>
    %328 = arith.subf %326, %327 : vector<16x1xf32>
    %cst_118 = arith.constant 0.000000e+00 : f32
    %329 = vector.broadcast %cst_118 : f32 to vector<16x1xf32>
    %330 = arith.maximumf %328, %329 : vector<16x1xf32>
    %331 = vector.broadcast %324 : vector<16x1xf32> to vector<16x128xf32>
    %332 = arith.subf %317, %331 : vector<16x128xf32>
    %cst_119 = arith.constant 9.99999974E-6 : f32
    %333 = vector.broadcast %cst_119 : f32 to vector<16x1xf32>
    %334 = arith.addf %330, %333 : vector<16x1xf32>
    %335 = math.rsqrt %334 : vector<16x1xf32>
    %336 = vector.broadcast %335 : vector<16x1xf32> to vector<16x128xf32>
    %337 = arith.mulf %332, %336 : vector<16x128xf32>
    %338 = arith.mulf %337, %45 : vector<16x128xf32>
    %339 = arith.addf %338, %48 : vector<16x128xf32>
    %340 = arith.addf %315, %339 : vector<16x128xf32>
    %341 = arith.mulf %68, %296 : vector<16x128xf32>
    %342 = arith.mulf %72, %340 : vector<16x128xf32>
    %343 = arith.addf %341, %342 : vector<16x128xf32>
    %344 = arith.mulf %62, %299 : vector<16x128xf32>
    %345 = arith.mulf %66, %343 : vector<16x128xf32>
    %346 = arith.addf %344, %345 : vector<16x128xf32>
    %cst_120 = arith.constant 5.000000e-01 : f32
    %347 = vector.broadcast %cst_120 : f32 to vector<16x128xf32>
    %348 = arith.subf %346, %347 : vector<16x128xf32>
    %cst_121 = arith.constant 0.000000e+00 : f32
    %349 = vector.broadcast %cst_121 : f32 to vector<16x128xf32>
    %350 = arith.cmpf ogt, %348, %349 : vector<16x128xf32>
    %351 = arith.extui %350 : vector<16x128xi1> to vector<16x128xi32>
    %352 = arith.sitofp %351 : vector<16x128xi32> to vector<16x128xf32>
    %353 = arith.truncf %352 : vector<16x128xf32> to vector<16x128xbf16>
    %354 = arith.index_cast %c5_i32 : i32 to index
    %c0_122 = arith.constant 0 : index
    %c0_123 = arith.constant 0 : index
    %355 = vector.load %arg19[%354, %c0_122, %c0_123] : memref<8x16x128xbf16, #tpu.memory_space<vmem>>, vector<1x16x128xbf16>
    %356 = vector.shape_cast %355 : vector<1x16x128xbf16> to vector<16x128xbf16>
    %357 = vector.shape_cast %353 : vector<16x128xbf16> to vector<1x16x128xbf16>
    tpu.vector_store %arg19[%354, %c0_122, %c0_123], %357 {strides = array<i32>} : memref<8x16x128xbf16, #tpu.memory_space<vmem>>, vector<1x16x128xbf16>,
    %358 = arith.addf %311, %352 : vector<16x128xf32>
    %c6_i32 = arith.constant 6 : i32
    %359 = arith.index_cast %c6_i32 : i32 to index
    %c0_124 = arith.constant 0 : index
    %c0_125 = arith.constant 0 : index
    %360 = vector.load %arg20[%359, %c0_124, %c0_125] : memref<8x16x128xbf16, #tpu.memory_space<vmem>>, vector<1x16x128xbf16>
    %361 = vector.shape_cast %360 : vector<1x16x128xbf16> to vector<16x128xbf16>
    %362 = arith.extf %361 : vector<16x128xbf16> to vector<16x128xf32>
    %cst_126 = arith.constant dense<0.000000e+00> : vector<16x128xf32>
    %363 = tpu.matmul %353, %39, %cst_126 {dimension_numbers = #tpu.dot_dimension_numbers<[1], [0], [0], [1], [0, 0, 1, 1], [], []>} : vector<16x128xbf16>, vector<128x128xbf16>, vector<16x128xf32> -> vector<16x128xf32>
    %364 = arith.addf %363, %42 : vector<16x128xf32>
    %cst_127 = arith.constant dense<0.000000e+00> : vector<16xf32>
    %365 = vector.multi_reduction <add>, %364, %cst_127 [1] : vector<16x128xf32> to vector<16xf32>
    %366 = vector.shape_cast %365 : vector<16xf32> to vector<16x1xf32>
    %367 = arith.mulf %364, %364 : vector<16x128xf32>
    %cst_128 = arith.constant dense<0.000000e+00> : vector<16xf32>
    %368 = vector.multi_reduction <add>, %367, %cst_128 [1] : vector<16x128xf32> to vector<16xf32>
    %369 = vector.shape_cast %368 : vector<16xf32> to vector<16x1xf32>
    %cst_129 = arith.constant 3.125000e-02 : f32
    %370 = vector.broadcast %cst_129 : f32 to vector<16x1xf32>
    %371 = arith.mulf %366, %370 : vector<16x1xf32>
    %cst_130 = arith.constant 3.125000e-02 : f32
    %372 = vector.broadcast %cst_130 : f32 to vector<16x1xf32>
    %373 = arith.mulf %369, %372 : vector<16x1xf32>
    %374 = arith.mulf %371, %371 : vector<16x1xf32>
    %375 = arith.subf %373, %374 : vector<16x1xf32>
    %cst_131 = arith.constant 0.000000e+00 : f32
    %376 = vector.broadcast %cst_131 : f32 to vector<16x1xf32>
    %377 = arith.maximumf %375, %376 : vector<16x1xf32>
    %378 = vector.broadcast %371 : vector<16x1xf32> to vector<16x128xf32>
    %379 = arith.subf %364, %378 : vector<16x128xf32>
    %cst_132 = arith.constant 9.99999974E-6 : f32
    %380 = vector.broadcast %cst_132 : f32 to vector<16x1xf32>
    %381 = arith.addf %377, %380 : vector<16x1xf32>
    %382 = math.rsqrt %381 : vector<16x1xf32>
    %383 = vector.broadcast %382 : vector<16x1xf32> to vector<16x128xf32>
    %384 = arith.mulf %379, %383 : vector<16x128xf32>
    %385 = arith.mulf %384, %45 : vector<16x128xf32>
    %386 = arith.addf %385, %48 : vector<16x128xf32>
    %387 = arith.addf %362, %386 : vector<16x128xf32>
    %388 = arith.mulf %68, %343 : vector<16x128xf32>
    %389 = arith.mulf %72, %387 : vector<16x128xf32>
    %390 = arith.addf %388, %389 : vector<16x128xf32>
    %391 = arith.mulf %62, %346 : vector<16x128xf32>
    %392 = arith.mulf %66, %390 : vector<16x128xf32>
    %393 = arith.addf %391, %392 : vector<16x128xf32>
    %cst_133 = arith.constant 5.000000e-01 : f32
    %394 = vector.broadcast %cst_133 : f32 to vector<16x128xf32>
    %395 = arith.subf %393, %394 : vector<16x128xf32>
    %cst_134 = arith.constant 0.000000e+00 : f32
    %396 = vector.broadcast %cst_134 : f32 to vector<16x128xf32>
    %397 = arith.cmpf ogt, %395, %396 : vector<16x128xf32>
    %398 = arith.extui %397 : vector<16x128xi1> to vector<16x128xi32>
    %399 = arith.sitofp %398 : vector<16x128xi32> to vector<16x128xf32>
    %400 = arith.truncf %399 : vector<16x128xf32> to vector<16x128xbf16>
    %401 = arith.index_cast %c6_i32 : i32 to index
    %c0_135 = arith.constant 0 : index
    %c0_136 = arith.constant 0 : index
    %402 = vector.load %arg19[%401, %c0_135, %c0_136] : memref<8x16x128xbf16, #tpu.memory_space<vmem>>, vector<1x16x128xbf16>
    %403 = vector.shape_cast %402 : vector<1x16x128xbf16> to vector<16x128xbf16>
    %404 = vector.shape_cast %400 : vector<16x128xbf16> to vector<1x16x128xbf16>
    tpu.vector_store %arg19[%401, %c0_135, %c0_136], %404 {strides = array<i32>} : memref<8x16x128xbf16, #tpu.memory_space<vmem>>, vector<1x16x128xbf16>,
    %405 = arith.addf %358, %399 : vector<16x128xf32>
    %c7_i32 = arith.constant 7 : i32
    %406 = arith.index_cast %c7_i32 : i32 to index
    %c0_137 = arith.constant 0 : index
    %c0_138 = arith.constant 0 : index
    %407 = vector.load %arg20[%406, %c0_137, %c0_138] : memref<8x16x128xbf16, #tpu.memory_space<vmem>>, vector<1x16x128xbf16>
    %408 = vector.shape_cast %407 : vector<1x16x128xbf16> to vector<16x128xbf16>
    %409 = arith.extf %408 : vector<16x128xbf16> to vector<16x128xf32>
    %cst_139 = arith.constant dense<0.000000e+00> : vector<16x128xf32>
    %410 = tpu.matmul %400, %39, %cst_139 {dimension_numbers = #tpu.dot_dimension_numbers<[1], [0], [0], [1], [0, 0, 1, 1], [], []>} : vector<16x128xbf16>, vector<128x128xbf16>, vector<16x128xf32> -> vector<16x128xf32>
    %411 = arith.addf %410, %42 : vector<16x128xf32>
    %cst_140 = arith.constant dense<0.000000e+00> : vector<16xf32>
    %412 = vector.multi_reduction <add>, %411, %cst_140 [1] : vector<16x128xf32> to vector<16xf32>
    %413 = vector.shape_cast %412 : vector<16xf32> to vector<16x1xf32>
    %414 = arith.mulf %411, %411 : vector<16x128xf32>
    %cst_141 = arith.constant dense<0.000000e+00> : vector<16xf32>
    %415 = vector.multi_reduction <add>, %414, %cst_141 [1] : vector<16x128xf32> to vector<16xf32>
    %416 = vector.shape_cast %415 : vector<16xf32> to vector<16x1xf32>
    %cst_142 = arith.constant 3.125000e-02 : f32
    %417 = vector.broadcast %cst_142 : f32 to vector<16x1xf32>
    %418 = arith.mulf %413, %417 : vector<16x1xf32>
    %cst_143 = arith.constant 3.125000e-02 : f32
    %419 = vector.broadcast %cst_143 : f32 to vector<16x1xf32>
    %420 = arith.mulf %416, %419 : vector<16x1xf32>
    %421 = arith.mulf %418, %418 : vector<16x1xf32>
    %422 = arith.subf %420, %421 : vector<16x1xf32>
    %cst_144 = arith.constant 0.000000e+00 : f32
    %423 = vector.broadcast %cst_144 : f32 to vector<16x1xf32>
    %424 = arith.maximumf %422, %423 : vector<16x1xf32>
    %425 = vector.broadcast %418 : vector<16x1xf32> to vector<16x128xf32>
    %426 = arith.subf %411, %425 : vector<16x128xf32>
    %cst_145 = arith.constant 9.99999974E-6 : f32
    %427 = vector.broadcast %cst_145 : f32 to vector<16x1xf32>
    %428 = arith.addf %424, %427 : vector<16x1xf32>
    %429 = math.rsqrt %428 : vector<16x1xf32>
    %430 = vector.broadcast %429 : vector<16x1xf32> to vector<16x128xf32>
    %431 = arith.mulf %426, %430 : vector<16x128xf32>
    %432 = arith.mulf %431, %45 : vector<16x128xf32>
    %433 = arith.addf %432, %48 : vector<16x128xf32>
    %434 = arith.addf %409, %433 : vector<16x128xf32>
    %435 = arith.mulf %68, %390 : vector<16x128xf32>
    %436 = arith.mulf %72, %434 : vector<16x128xf32>
    %437 = arith.addf %435, %436 : vector<16x128xf32>
    %438 = arith.mulf %62, %393 : vector<16x128xf32>
    %439 = arith.mulf %66, %437 : vector<16x128xf32>
    %440 = arith.addf %438, %439 : vector<16x128xf32>
    %cst_146 = arith.constant 5.000000e-01 : f32
    %441 = vector.broadcast %cst_146 : f32 to vector<16x128xf32>
    %442 = arith.subf %440, %441 : vector<16x128xf32>
    %cst_147 = arith.constant 0.000000e+00 : f32
    %443 = vector.broadcast %cst_147 : f32 to vector<16x128xf32>
    %444 = arith.cmpf ogt, %442, %443 : vector<16x128xf32>
    %445 = arith.extui %444 : vector<16x128xi1> to vector<16x128xi32>
    %446 = arith.sitofp %445 : vector<16x128xi32> to vector<16x128xf32>
    %447 = arith.truncf %446 : vector<16x128xf32> to vector<16x128xbf16>
    %448 = arith.index_cast %c7_i32 : i32 to index
    %c0_148 = arith.constant 0 : index
    %c0_149 = arith.constant 0 : index
    %449 = vector.load %arg19[%448, %c0_148, %c0_149] : memref<8x16x128xbf16, #tpu.memory_space<vmem>>, vector<1x16x128xbf16>
    %450 = vector.shape_cast %449 : vector<1x16x128xbf16> to vector<16x128xbf16>
    %451 = vector.shape_cast %447 : vector<16x128xbf16> to vector<1x16x128xbf16>
    tpu.vector_store %arg19[%448, %c0_148, %c0_149], %451 {strides = array<i32>} : memref<8x16x128xbf16, #tpu.memory_space<vmem>>, vector<1x16x128xbf16>,
    %452 = arith.addf %405, %446 : vector<16x128xf32>
    %c8_i32 = arith.constant 8 : i32
    %c0_150 = arith.constant 0 : index
    %c0_151 = arith.constant 0 : index
    %453 = vector.load %arg21[%c0_150, %c0_151] : memref<16x128xf32, #tpu.memory_space<vmem>>, vector<16x128xf32>
    tpu.vector_store %arg21[%c0_150, %c0_151], %440 {strides = array<i32>} : memref<16x128xf32, #tpu.memory_space<vmem>>, vector<16x128xf32>,
    %c0_152 = arith.constant 0 : index
    %c0_153 = arith.constant 0 : index
    %454 = vector.load %arg22[%c0_152, %c0_153] : memref<16x128xf32, #tpu.memory_space<vmem>>, vector<16x128xf32>
    tpu.vector_store %arg22[%c0_152, %c0_153], %437 {strides = array<i32>} : memref<16x128xf32, #tpu.memory_space<vmem>>, vector<16x128xf32>,
    %c0_154 = arith.constant 0 : index
    %c0_155 = arith.constant 0 : index
    %455 = vector.load %arg23[%c0_154, %c0_155] : memref<16x128xbf16, #tpu.memory_space<vmem>>, vector<16x128xbf16>
    tpu.vector_store %arg23[%c0_154, %c0_155], %447 {strides = array<i32>} : memref<16x128xbf16, #tpu.memory_space<vmem>>, vector<16x128xbf16>,
    %c0_156 = arith.constant 0 : index
    %c0_157 = arith.constant 0 : index
    %456 = vector.load %arg24[%c0_156, %c0_157] : memref<16x128xf32, #tpu.memory_space<vmem>>, vector<16x128xf32>
    tpu.vector_store %arg24[%c0_156, %c0_157], %452 {strides = array<i32>} : memref<16x128xf32, #tpu.memory_space<vmem>>, vector<16x128xf32>,
    %c0_i32_158 = arith.constant 0 : i32
    %457 = arith.cmpi eq, %arg1, %c0_i32_158 : i32
    %458 = arith.extui %457 : i1 to i32
    %c0_i32_159 = arith.constant 0 : i32
    %459 = arith.cmpi ne, %458, %c0_i32_159 : i32
    scf.if %459 {
      %c0_160 = arith.constant 0 : index
      %c0_161 = arith.constant 0 : index
      %460 = vector.load %arg24[%c0_160, %c0_161] : memref<16x128xf32, #tpu.memory_space<vmem>>, vector<16x128xf32>
      %cst_162 = arith.constant 1.250000e-01 : f32
      %461 = vector.broadcast %cst_162 : f32 to vector<16x128xf32>
      %462 = arith.mulf %460, %461 : vector<16x128xf32>
      %c0_163 = arith.constant 0 : index
      %c0_164 = arith.constant 0 : index
      %463 = vector.load %arg14[%c0_163, %c0_164] : memref<128x10xf32, #tpu.memory_space<vmem>>, vector<128x10xf32>
      %cst_165 = arith.constant dense<0.000000e+00> : vector<16x10xf32>
      %464 = tpu.matmul %462, %463, %cst_165 {dimension_numbers = #tpu.dot_dimension_numbers<[1], [0], [0], [1], [0, 0, 1, 1], [], []>} : vector<16x128xf32>, vector<128x10xf32>, vector<16x10xf32> -> vector<16x10xf32>
      %c0_166 = arith.constant 0 : index
      %c0_167 = arith.constant 0 : index
      %465 = vector.load %arg15[%c0_166, %c0_167] : memref<1x10xf32, #tpu.memory_space<vmem>>, vector<1x10xf32>
      %466 = vector.broadcast %465 : vector<1x10xf32> to vector<16x10xf32>
      %467 = arith.addf %464, %466 : vector<16x10xf32>
      %c0_168 = arith.constant 0 : index
      %c0_169 = arith.constant 0 : index
      %468 = vector.load %arg16[%c0_168, %c0_169] : memref<1x10xf32, #tpu.memory_space<vmem>>, vector<1x10xf32>
      %c0_170 = arith.constant 0 : index
      %c0_171 = arith.constant 0 : index
      %469 = vector.load %arg17[%c0_170, %c0_171] : memref<1x10xf32, #tpu.memory_space<vmem>>, vector<1x10xf32>
      %cst_172 = arith.constant dense<0.000000e+00> : vector<16xf32>
      %470 = vector.multi_reduction <add>, %467, %cst_172 [1] : vector<16x10xf32> to vector<16xf32>
      %471 = vector.shape_cast %470 : vector<16xf32> to vector<16x1xf32>
      %472 = arith.mulf %467, %467 : vector<16x10xf32>
      %cst_173 = arith.constant dense<0.000000e+00> : vector<16xf32>
      %473 = vector.multi_reduction <add>, %472, %cst_173 [1] : vector<16x10xf32> to vector<16xf32>
      %474 = vector.shape_cast %473 : vector<16xf32> to vector<16x1xf32>
      %cst_174 = arith.constant 1.000000e-01 : f32
      %475 = vector.broadcast %cst_174 : f32 to vector<16x1xf32>
      %476 = arith.mulf %471, %475 : vector<16x1xf32>
      %cst_175 = arith.constant 1.000000e-01 : f32
      %477 = vector.broadcast %cst_175 : f32 to vector<16x1xf32>
      %478 = arith.mulf %474, %477 : vector<16x1xf32>
      %479 = arith.mulf %476, %476 : vector<16x1xf32>
      %480 = arith.subf %478, %479 : vector<16x1xf32>
      %cst_176 = arith.constant 0.000000e+00 : f32
      %481 = vector.broadcast %cst_176 : f32 to vector<16x1xf32>
      %482 = arith.maximumf %480, %481 : vector<16x1xf32>
      %483 = vector.broadcast %476 : vector<16x1xf32> to vector<16x10xf32>
      %484 = arith.subf %467, %483 : vector<16x10xf32>
      %cst_177 = arith.constant 9.99999974E-6 : f32
      %485 = vector.broadcast %cst_177 : f32 to vector<16x1xf32>
      %486 = arith.addf %482, %485 : vector<16x1xf32>
      %487 = math.rsqrt %486 : vector<16x1xf32>
      %488 = vector.broadcast %487 : vector<16x1xf32> to vector<16x10xf32>
      %489 = arith.mulf %484, %488 : vector<16x10xf32>
      %490 = vector.broadcast %468 : vector<1x10xf32> to vector<16x10xf32>
      %491 = arith.mulf %489, %490 : vector<16x10xf32>
      %492 = vector.broadcast %469 : vector<1x10xf32> to vector<16x10xf32>
      %493 = arith.addf %491, %492 : vector<16x10xf32>
      %c0_178 = arith.constant 0 : index
      %c0_179 = arith.constant 0 : index
      %494 = vector.load %arg18[%c0_178, %c0_179] : memref<16x10xf32, #tpu.memory_space<vmem>>, vector<16x10xf32>
      tpu.vector_store %arg18[%c0_178, %c0_179], %493 {strides = array<i32>} : memref<16x10xf32, #tpu.memory_space<vmem>>, vector<16x10xf32>,
    } else {
    }
    return
  }
  func.func @transform_0(%arg0: i32, %arg1: i32) -> (i32, i32, i32) {
    %c0_i32 = arith.constant 0 : i32
    %c0_i32_0 = arith.constant 0 : i32
    return %arg1, %arg0, %c0_i32 : i32, i32, i32
  }
  func.func @transform_1(%arg0: i32, %arg1: i32) -> (i32, i32) {
    %c0_i32 = arith.constant 0 : i32
    %c0_i32_0 = arith.constant 0 : i32
    %c0_i32_1 = arith.constant 0 : i32
    return %c0_i32, %c0_i32_0 : i32, i32
  }
  func.func @transform_2(%arg0: i32, %arg1: i32) -> (i32, i32) {
    %c0_i32 = arith.constant 0 : i32
    %c0_i32_0 = arith.constant 0 : i32
    %c0_i32_1 = arith.constant 0 : i32
    return %c0_i32, %c0_i32_0 : i32, i32
  }
  func.func @transform_3(%arg0: i32, %arg1: i32) -> (i32, i32) {
    %c0_i32 = arith.constant 0 : i32
    %c0_i32_0 = arith.constant 0 : i32
    %c0_i32_1 = arith.constant 0 : i32
    return %c0_i32, %c0_i32_0 : i32, i32
  }
  func.func @transform_4(%arg0: i32, %arg1: i32) -> (i32, i32) {
    %c0_i32 = arith.constant 0 : i32
    %c0_i32_0 = arith.constant 0 : i32
    %c0_i32_1 = arith.constant 0 : i32
    return %c0_i32, %c0_i32_0 : i32, i32
  }
  func.func @transform_5(%arg0: i32, %arg1: i32) -> (i32, i32) {
    %c0_i32 = arith.constant 0 : i32
    %c0_i32_0 = arith.constant 0 : i32
    %c0_i32_1 = arith.constant 0 : i32
    return %c0_i32, %c0_i32_0 : i32, i32
  }
  func.func @transform_6(%arg0: i32, %arg1: i32) -> (i32, i32) {
    %c0_i32 = arith.constant 0 : i32
    %c0_i32_0 = arith.constant 0 : i32
    %c0_i32_1 = arith.constant 0 : i32
    return %c0_i32, %c0_i32_0 : i32, i32
  }
  func.func @transform_7(%arg0: i32, %arg1: i32) -> (i32, i32) {
    %c0_i32 = arith.constant 0 : i32
    %c0_i32_0 = arith.constant 0 : i32
    %c0_i32_1 = arith.constant 0 : i32
    return %c0_i32, %c0_i32_0 : i32, i32
  }
  func.func @transform_8(%arg0: i32, %arg1: i32) -> (i32, i32) {
    %c0_i32 = arith.constant 0 : i32
    %c0_i32_0 = arith.constant 0 : i32
    %c0_i32_1 = arith.constant 0 : i32
    return %c0_i32, %c0_i32_0 : i32, i32
  }
  func.func @transform_9(%arg0: i32, %arg1: i32) -> (i32, i32) {
    %c0_i32 = arith.constant 0 : i32
    %c0_i32_0 = arith.constant 0 : i32
    %c0_i32_1 = arith.constant 0 : i32
    return %c0_i32, %c0_i32_0 : i32, i32
  }
  func.func @transform_10(%arg0: i32, %arg1: i32) -> (i32, i32) {
    %c0_i32 = arith.constant 0 : i32
    %c0_i32_0 = arith.constant 0 : i32
    %c0_i32_1 = arith.constant 0 : i32
    return %c0_i32, %c0_i32_0 : i32, i32
  }
  func.func @transform_11(%arg0: i32, %arg1: i32) -> (i32, i32) {
    %c0_i32 = arith.constant 0 : i32
    %c0_i32_0 = arith.constant 0 : i32
    return %arg0, %c0_i32 : i32, i32
  }
  func.func @transform_12(%arg0: i32, %arg1: i32) -> (i32, i32) {
    %c0_i32 = arith.constant 0 : i32
    %c0_i32_0 = arith.constant 0 : i32
    %c0_i32_1 = arith.constant 0 : i32
    return %c0_i32, %c0_i32_0 : i32, i32
  }
  func.func @transform_13(%arg0: i32, %arg1: i32) -> (i32, i32) {
    %c0_i32 = arith.constant 0 : i32
    %c0_i32_0 = arith.constant 0 : i32
    %c0_i32_1 = arith.constant 0 : i32
    return %c0_i32, %c0_i32_0 : i32, i32
  }
  func.func @transform_14(%arg0: i32, %arg1: i32) -> (i32, i32) {
    %c0_i32 = arith.constant 0 : i32
    %c0_i32_0 = arith.constant 0 : i32
    %c0_i32_1 = arith.constant 0 : i32
    return %c0_i32, %c0_i32_0 : i32, i32
  }
  func.func @transform_15(%arg0: i32, %arg1: i32) -> (i32, i32) {
    %c0_i32 = arith.constant 0 : i32
    %c0_i32_0 = arith.constant 0 : i32
    %c0_i32_1 = arith.constant 0 : i32
    return %c0_i32, %c0_i32_0 : i32, i32
  }
  func.func @transform_16(%arg0: i32, %arg1: i32) -> (i32, i32) {
    %c0_i32 = arith.constant 0 : i32
    %c0_i32_0 = arith.constant 0 : i32
    return %arg0, %c0_i32 : i32, i32
  }
  func.func @transform_17(%arg0: i32, %arg1: i32) -> (i32, i32, i32) {
    %c0_i32 = arith.constant 0 : i32
    %c0_i32_0 = arith.constant 0 : i32
    return %arg1, %arg0, %c0_i32 : i32, i32, i32
  }
}

</mosaic_0001>

<llo_original>
// kernel: tpu_custom_call.1
$region0: #{tpu_custom_call.1}
  #allocation0 [shape = 'u32[]', space=smem, size = 0x4, offset = 0x4, fixed_abs, tag = 'smem constant byte address 0x4 - core index']
  #allocation1 [shape = 'u32[144,128]{1,0:T(1,128)}', space=vmem, size = 0x12000, scoped, tag = 'internal scratch']
  #allocation2 [shape = 'bf16[8,16,128]{2,1,0:T(16,128)(2,1)}', space=vmem, size = 0x8000, scoped, tag = 'scratch operand']
  #allocation3 [shape = 'f32[16,128]{1,0:T(8,128)}', space=vmem, size = 0x2000, scoped, tag = 'scratch operand']
  #allocation4 [shape = 'f32[16,128]{1,0:T(8,128)}', space=vmem, size = 0x2000, scoped, tag = 'scratch operand']
  #allocation5 [shape = 'bf16[16,128]{1,0:T(16,128)(2,1)}', space=vmem, size = 0x1000, scoped, tag = 'scratch operand']
  #allocation6 [shape = 'f32[16,128]{1,0:T(8,128)}', space=vmem, size = 0x2000, scoped, tag = 'scratch operand']
  %s0 = inlined_call_operand.vmem [shape: bf16[8,16,16], index: 0, kind: input, shape index: {}]
  %s1 = inlined_call_operand.hbm [shape: bf16[16,128], index: 1, kind: input, shape index: {}]
  %s2 = inlined_call_operand.vmem [shape: f32[1,128], index: 2, kind: input, shape index: {}]
  %s3 = inlined_call_operand.vmem [shape: f32[1,128], index: 3, kind: input, shape index: {}]
  %s4 = inlined_call_operand.vmem [shape: f32[1,128], index: 4, kind: input, shape index: {}]
  %s5 = inlined_call_operand.vmem [shape: bf16[128,128], index: 5, kind: input, shape index: {}]
  %s6 = inlined_call_operand.vmem [shape: f32[1,128], index: 6, kind: input, shape index: {}]
  %s7 = inlined_call_operand.vmem [shape: f32[1,128], index: 7, kind: input, shape index: {}]
  %s8 = inlined_call_operand.vmem [shape: f32[1,128], index: 8, kind: input, shape index: {}]
  %s9 = inlined_call_operand.vmem [shape: f32[1,128], index: 9, kind: input, shape index: {}]
  %s10 = inlined_call_operand.vmem [shape: f32[1,128], index: 10, kind: input, shape index: {}]
  %s11 = inlined_call_operand.vmem [shape: f32[16,128], index: 11, kind: input, shape index: {}]
  %s12 = inlined_call_operand.vmem [shape: f32[128,10], index: 12, kind: input, shape index: {}]
  %s13 = inlined_call_operand.vmem [shape: f32[1,10], index: 13, kind: input, shape index: {}]
  %s14 = inlined_call_operand.vmem [shape: f32[1,10], index: 14, kind: input, shape index: {}]
  %s15 = inlined_call_operand.vmem [shape: f32[1,10], index: 15, kind: input, shape index: {}]
  %s16 = inlined_call_operand.hbm [shape: f32[16,10], index: 16, kind: output, shape index: {0}]
  %s17 = inlined_call_operand.hbm [shape: bf16[8,16,128], index: 17, kind: output, shape index: {1}]
  %18 = xla_tuple %s16, %s17
  %s19 = sld [smem:[#allocation0]]
  $region94: #{tpu_custom_call.1} parent=0
    _
  %s21 = ssub.s32 1, %s19
  %s22 = scalar_select 0, %s21, %s19
  $region1: #{tpu_custom_call.1} parent=0
    #allocation7 [shape = 'u8[4096]{0}', space=vmem, size = 0x1000, scoped, tag = 'input window, operand 1, single buffered']
    #allocation8 [shape = 's32[1]{0}', space=sflag, size = 0x4, scoped, tag = 'scoped memory for tpu_custom_call.1']
    #allocation9 [shape = 's32[1]{0}', space=sflag, size = 0x4, scoped, tag = 'scoped memory for tpu_custom_call.1']
    #allocation10 [shape = 'u8[8192]{0}', space=vmem, size = 0x2000, scoped, tag = 'output window, operand 0, single buffered']
    #allocation11 [shape = 'u8[32768]{0}', space=vmem, size = 0x8000, scoped, tag = 'output window, operand 1, single buffered']
    #allocation12 [shape = 's32[1]{0}', space=sflag, size = 0x4, scoped, tag = 'scoped memory for tpu_custom_call.1']
    %23 = vsyncpa [#allocation8], 0
    %24 = vsyncpa [#allocation9], 0
    %25 = vsyncpa [#allocation12], 0
    // Predicated region
    $region2: #{tpu_custom_call.1} parent=1 // pred_check
      _
    $region3: #{tpu_custom_call.1} parent=1 // pred_check_branch
      %27 = sbr.rel (0) target = $region5
    $region4: #{tpu_custom_call.1} parent=1 // pred_region
      _
    $region5: #{tpu_custom_call.1} parent=1 // pred_fallthru
      _
    // Predicated region
    $region6: #{tpu_custom_call.1} parent=1 // pred_check
      _
    $region7: #{tpu_custom_call.1} parent=1 // pred_check_branch
      %29 = sbr.rel (0) target = $region9
    $region8: #{tpu_custom_call.1} parent=1 // pred_region
      %s31 = ssub.s32 128, 128
      %32 = vsyncadd [#allocation8], %s31
      %s33 = sshll.u32 [#allocation7], 4
      %s34 = int_to_ptr.vmem [resolvable:$true] %s33
      %39 = dma.hbm_to_vmem [thread:$0]  %s1, 128, %s34, [#allocation8], 64, 64, 4
    $region9: #{tpu_custom_call.1} parent=1 // pred_fallthru
      _
    // Predicated region
    $region10: #{tpu_custom_call.1} parent=1 // pred_check
      _
    $region11: #{tpu_custom_call.1} parent=1 // pred_check_branch
      %41 = sbr.rel (0) target = $region13
    $region12: #{tpu_custom_call.1} parent=1 // pred_region
      _
    $region13: #{tpu_custom_call.1} parent=1 // pred_fallthru
      _
    // Predicated region
    $region14: #{tpu_custom_call.1} parent=1 // pred_check
      _
    $region15: #{tpu_custom_call.1} parent=1 // pred_check_branch
      %43 = sbr.rel (0) target = $region17
    $region16: #{tpu_custom_call.1} parent=1 // pred_region
      _
    $region17: #{tpu_custom_call.1} parent=1 // pred_fallthru
      _
    // Predicated region
    $region18: #{tpu_custom_call.1} parent=1 // pred_check
      _
    $region19: #{tpu_custom_call.1} parent=1 // pred_check_branch
      %45 = sbr.rel (0) target = $region21
    $region20: #{tpu_custom_call.1} parent=1 // pred_region
      _
    $region21: #{tpu_custom_call.1} parent=1 // pred_fallthru
      _
    // Predicated region
    $region22: #{tpu_custom_call.1} parent=1 // pred_check
      _
    $region23: #{tpu_custom_call.1} parent=1 // pred_check_branch
      %47 = sbr.rel (0) target = $region25
    $region24: #{tpu_custom_call.1} parent=1 // pred_region
      _
    $region25: #{tpu_custom_call.1} parent=1 // pred_fallthru
      _
    // Predicated region
    $region26: #{tpu_custom_call.1} parent=1 // pred_check
      _
    $region27: #{tpu_custom_call.1} parent=1 // pred_check_branch
      %49 = sbr.rel (0) target = $region29
    $region28: #{tpu_custom_call.1} parent=1 // pred_region
      _
    $region29: #{tpu_custom_call.1} parent=1 // pred_fallthru
      _
    // Predicated region
    $region30: #{tpu_custom_call.1} parent=1 // pred_check
      _
    $region31: #{tpu_custom_call.1} parent=1 // pred_check_branch
      %51 = sbr.rel (0) target = $region33
    $region32: #{tpu_custom_call.1} parent=1 // pred_region
      _
    $region33: #{tpu_custom_call.1} parent=1 // pred_fallthru
      _
    // Predicated region
    $region34: #{tpu_custom_call.1} parent=1 // pred_check
      _
    $region35: #{tpu_custom_call.1} parent=1 // pred_check_branch
      %53 = sbr.rel (0) target = $region37
    $region36: #{tpu_custom_call.1} parent=1 // pred_region
      _
    $region37: #{tpu_custom_call.1} parent=1 // pred_fallthru
      _
    // Predicated region
    $region38: #{tpu_custom_call.1} parent=1 // pred_check
      _
    $region39: #{tpu_custom_call.1} parent=1 // pred_check_branch
      %55 = sbr.rel (0) target = $region41
    $region40: #{tpu_custom_call.1} parent=1 // pred_region
      _
    $region41: #{tpu_custom_call.1} parent=1 // pred_fallthru
      _
    // Predicated region
    $region42: #{tpu_custom_call.1} parent=1 // pred_check
      _
    $region43: #{tpu_custom_call.1} parent=1 // pred_check_branch
      %57 = sbr.rel (0) target = $region45
    $region44: #{tpu_custom_call.1} parent=1 // pred_region
      _
    $region45: #{tpu_custom_call.1} parent=1 // pred_fallthru
      _
    // Predicated region
    $region46: #{tpu_custom_call.1} parent=1 // pred_check
      _
    $region47: #{tpu_custom_call.1} parent=1 // pred_check_branch
      %59 = sbr.rel (0) target = $region49
    $region48: #{tpu_custom_call.1} parent=1 // pred_region
      _
    $region49: #{tpu_custom_call.1} parent=1 // pred_fallthru
      _
    // Predicated region
    $region50: #{tpu_custom_call.1} parent=1 // pred_check
      _
    $region51: #{tpu_custom_call.1} parent=1 // pred_check_branch
      %61 = sbr.rel (0) target = $region53
    $region52: #{tpu_custom_call.1} parent=1 // pred_region
      _
    $region53: #{tpu_custom_call.1} parent=1 // pred_fallthru
      _
    // Predicated region
    $region54: #{tpu_custom_call.1} parent=1 // pred_check
      _
    $region55: #{tpu_custom_call.1} parent=1 // pred_check_branch
      %63 = sbr.rel (0) target = $region57
    $region56: #{tpu_custom_call.1} parent=1 // pred_region
      _
    $region57: #{tpu_custom_call.1} parent=1 // pred_fallthru
      _
    // Predicated region
    $region58: #{tpu_custom_call.1} parent=1 // pred_check
      _
    $region59: #{tpu_custom_call.1} parent=1 // pred_check_branch
      %65 = sbr.rel (0) target = $region61
    $region60: #{tpu_custom_call.1} parent=1 // pred_region
      _
    $region61: #{tpu_custom_call.1} parent=1 // pred_fallthru
      _
    // Predicated region
    $region62: #{tpu_custom_call.1} parent=1 // pred_check
      _
    $region63: #{tpu_custom_call.1} parent=1 // pred_check_branch
      %67 = sbr.rel (0) target = $region65
    $region64: #{tpu_custom_call.1} parent=1 // pred_region
      _
    $region65: #{tpu_custom_call.1} parent=1 // pred_fallthru
      _
    // Predicated region
    $region66: #{tpu_custom_call.1} parent=1 // pred_check
      _
    $region67: #{tpu_custom_call.1} parent=1 // pred_check_branch
      %69 = sbr.rel (0) target = $region69
    $region68: #{tpu_custom_call.1} parent=1 // pred_region
      %70 = dma.done [#allocation8], 128
    $region69: #{tpu_custom_call.1} parent=1 // pred_fallthru
      _
    %p72 = scmp.eq.s32.totalorder 0, 0
    // Predicated region
    $region70: #{tpu_custom_call.1} parent=1 // pred_check
      %p73 = pneg %p72
    $region71: #{tpu_custom_call.1} parent=1 // pred_check_branch
      %75 = sbr.rel (%p73) target = $region73
    $region72: #{tpu_custom_call.1} parent=1 // pred_region
      %v76 = vld [vmem:[%s11] sm:$0xff]
      %v77 = vld [vmem:[%s11 + $0x8] sm:$0xff]
      %78 = vst [vmem:[#allocation3] sm:$0xff] %v76
      %79 = vst [vmem:[#allocation3 + $0x8] sm:$0xff] %v77
      %80 = vst [vmem:[#allocation4] sm:$0xff] 0.0
      %81 = vst [vmem:[#allocation4 + $0x8] sm:$0xff] 0.0
      %82 = vst [vmem:[#allocation5] sm:$0xff] 0
      %83 = vst [vmem:[#allocation6] sm:$0xff] 0.0
      %84 = vst [vmem:[#allocation6 + $0x8] sm:$0xff] 0.0
    $region73: #{tpu_custom_call.1} parent=1 // pred_fallthru
      _
    %v85 = vld [vmem:[%s0] sm:$0xf]
    %v86 = vld [vmem:[%s0 + $0x4] sm:$0xf]
    %v87 = vld [vmem:[%s0 + $0x8] sm:$0xf]
    %v88 = vld [vmem:[%s0 + $0xc] sm:$0xf]
    %v89 = vld [vmem:[%s0 + $0x10] sm:$0xf]
    %v90 = vld [vmem:[%s0 + $0x14] sm:$0xf]
    %v91 = vld [vmem:[%s0 + $0x18] sm:$0xf]
    %v92 = vld [vmem:[%s0 + $0x1c] sm:$0xf]
    %v93 = vld [vmem:[%s0 + $0x20] sm:$0xf]
    %v94 = vld [vmem:[%s0 + $0x24] sm:$0xf]
    %v95 = vld [vmem:[%s0 + $0x28] sm:$0xf]
    %v96 = vld [vmem:[%s0 + $0x2c] sm:$0xf]
    %v97 = vld [vmem:[%s0 + $0x30] sm:$0xf]
    %v98 = vld [vmem:[%s0 + $0x34] sm:$0xf]
    %v99 = vld [vmem:[%s0 + $0x38] sm:$0xf]
    %v100 = vld [vmem:[%s0 + $0x3c] sm:$0xf]
    %v101 = vld [vmem:[#allocation7] sm:$0xf]
    %v102 = vld [vmem:[#allocation7 + $0x4] sm:$0xf]
    %v103 = vld [vmem:[%s2] sm:$0x1]
    %v105 = vlaneseq
    %v106 = vshrl.u32 %v105, 7
    %v107 = vsub.s32 0, %v106
    %v108 = vrot.slane %v103, %v107
    %v126 = vunpack.c.l.b16 %v85
    %v127 = vunpack.c.l.b16 %v86
    %v128 = vunpack.c.l.b16 %v87
    %v129 = vunpack.c.l.b16 %v88
    %v130 = vunpack.c.l.b16 %v89
    %v131 = vunpack.c.l.b16 %v90
    %v132 = vunpack.c.l.b16 %v91
    %v133 = vunpack.c.l.b16 %v92
    %v134 = vunpack.c.l.b16 %v93
    %v135 = vunpack.c.l.b16 %v94
    %v136 = vunpack.c.l.b16 %v95
    %v137 = vunpack.c.l.b16 %v96
    %v138 = vunpack.c.l.b16 %v97
    %v139 = vunpack.c.l.b16 %v98
    %v140 = vunpack.c.l.b16 %v99
    %v141 = vunpack.c.l.b16 %v100
    %v142 = vpack.c.b16 %v127, %v126
    %v143 = vpack.c.b16 %v129, %v128
    %v144 = vpack.c.b16 %v131, %v130
    %v145 = vpack.c.b16 %v133, %v132
    %v146 = vpack.c.b16 %v135, %v134
    %v147 = vpack.c.b16 %v137, %v136
    %v148 = vpack.c.b16 %v139, %v138
    %v149 = vpack.c.b16 %v141, %v140
    %v152 = vunpack.c.l.b16 %v101
    %v153 = vunpack.c.l.b16 %v102
    %v154 = vpack.c.b16 %v153, %v152
    %vm156 = vcmask 130048
    %v158 = vsel %vm156, %v142, 0
    %v161 = vsel %vm156, %v143, 0
    %v164 = vsel %vm156, %v144, 0
    %v167 = vsel %vm156, %v145, 0
    %v170 = vsel %vm156, %v146, 0
    %v173 = vsel %vm156, %v147, 0
    %v176 = vsel %vm156, %v148, 0
    %v179 = vsel %vm156, %v149, 0
    %181 = vmatprep.subr.bf16.mxu0 0
    %182 = vmatpush1.bf16.msra.mxu0 %v154
    %183 = vmatprep.subr.bf16.mxu0 0
    %184 = vmatpush1.bf16.msra.mxu0 0
    %185 = vmatprep.subr.bf16.mxu0 0
    %186 = vmatpush1.bf16.msra.mxu0 0
    %187 = vmatprep.subr.bf16.mxu0 0
    %188 = vmatpush1.bf16.msra.mxu0 0
    %189 = vmatprep.subr.bf16.mxu0 0
    %190 = vmatpush1.bf16.msra.mxu0 0
    %191 = vmatprep.subr.bf16.mxu0 0
    %192 = vmatpush1.bf16.msra.mxu0 0
    %193 = vmatprep.subr.bf16.mxu0 0
    %194 = vmatpush1.bf16.msra.mxu0 0
    %195 = vmatprep.subr.bf16.mxu0 0
    %196 = vmatpush1.bf16.msra.mxu0 0
    %197 = vmatprep.subr.bf16.mxu0 0
    %198 = vmatpush1.bf16.msra.mxu0 0
    %199 = vmatprep.subr.bf16.mxu0 0
    %200 = vmatpush1.bf16.msra.mxu0 0
    %201 = vmatprep.subr.bf16.mxu0 0
    %202 = vmatpush1.bf16.msra.mxu0 0
    %203 = vmatprep.subr.bf16.mxu0 0
    %204 = vmatpush1.bf16.msra.mxu0 0
    %205 = vmatprep.subr.bf16.mxu0 0
    %206 = vmatpush1.bf16.msra.mxu0 0
    %207 = vmatprep.subr.bf16.mxu0 0
    %208 = vmatpush1.bf16.msra.mxu0 0
    %209 = vmatprep.subr.bf16.mxu0 0
    %210 = vmatpush1.bf16.msra.mxu0 0
    %211 = vmatprep.subr.bf16.mxu0 0
    %212 = vmatpush1.bf16.msra.mxu0 0
    %213 = vmatprep.mubr.bf16.mxu0 0
    %214 = vmatmul.mubr.bf16.gmra.mrb[0].mxu0 %v158
    %v215 = vpop.f32.mrb[0].mxu0
    %v216 = vadd.f32 %v108, %v215
    %v217 = vpop.f32.mrb[0].mxu0
    %v218 = vpop.f32.mrb[0].mxu0
    %v219 = vadd.f32 %v108, %v218
    %v220 = vpop.f32.mrb[0].mxu0
    %221 = vmatprep.mubr.bf16.mxu0 0
    %222 = vmatmul.mubr.bf16.gmra.mrb[0].mxu0 %v161
    %v223 = vpop.f32.mrb[0].mxu0
    %v224 = vadd.f32 %v108, %v223
    %v225 = vpop.f32.mrb[0].mxu0
    %v226 = vpop.f32.mrb[0].mxu0
    %v227 = vadd.f32 %v108, %v226
    %v228 = vpop.f32.mrb[0].mxu0
    %229 = vmatprep.mubr.bf16.mxu0 0
    %230 = vmatmul.mubr.bf16.gmra.mrb[0].mxu0 %v164
    %v231 = vpop.f32.mrb[0].mxu0
    %v232 = vadd.f32 %v108, %v231
    %v233 = vpop.f32.mrb[0].mxu0
    %v234 = vpop.f32.mrb[0].mxu0
    %v235 = vadd.f32 %v108, %v234
    %v236 = vpop.f32.mrb[0].mxu0
    %237 = vmatprep.mubr.bf16.mxu0 0
    %238 = vmatmul.mubr.bf16.gmra.mrb[0].mxu0 %v167
    %v239 = vpop.f32.mrb[0].mxu0
    %v240 = vadd.f32 %v108, %v239
    %v241 = vpop.f32.mrb[0].mxu0
    %v242 = vpop.f32.mrb[0].mxu0
    %v243 = vadd.f32 %v108, %v242
    %v244 = vpop.f32.mrb[0].mxu0
    %245 = vmatprep.mubr.bf16.mxu0 0
    %246 = vmatmul.mubr.bf16.gmra.mrb[0].mxu0 %v170
    %v247 = vpop.f32.mrb[0].mxu0
    %v248 = vadd.f32 %v108, %v247
    %v249 = vpop.f32.mrb[0].mxu0
    %v250 = vpop.f32.mrb[0].mxu0
    %v251 = vadd.f32 %v108, %v250
    %v252 = vpop.f32.mrb[0].mxu0
    %253 = vmatprep.mubr.bf16.mxu0 0
    %254 = vmatmul.mubr.bf16.gmra.mrb[0].mxu0 %v173
    %v255 = vpop.f32.mrb[0].mxu0
    %v256 = vadd.f32 %v108, %v255
    %v257 = vpop.f32.mrb[0].mxu0
    %v258 = vpop.f32.mrb[0].mxu0
    %v259 = vadd.f32 %v108, %v258
    %v260 = vpop.f32.mrb[0].mxu0
    %261 = vmatprep.mubr.bf16.mxu0 0
    %262 = vmatmul.mubr.bf16.gmra.mrb[0].mxu0 %v176
    %v263 = vpop.f32.mrb[0].mxu0
    %v264 = vadd.f32 %v108, %v263
    %v265 = vpop.f32.mrb[0].mxu0
    %v266 = vpop.f32.mrb[0].mxu0
    %v267 = vadd.f32 %v108, %v266
    %v268 = vpop.f32.mrb[0].mxu0
    %269 = vmatprep.mubr.bf16.mxu0 0
    %270 = vmatmul.mubr.bf16.gmra.mrb[0].mxu0 %v179
    %v271 = vpop.f32.mrb[0].mxu0
    %v272 = vadd.f32 %v108, %v271
    %v273 = vpop.f32.mrb[0].mxu0
    %v274 = vpop.f32.mrb[0].mxu0
    %v275 = vadd.f32 %v108, %v274
    %v276 = vpop.f32.mrb[0].mxu0
    %277 = vdwg.mxu0
    %v278 = vld [vmem:[%s3] sm:$0x1]
    %v279 = vld [vmem:[%s4] sm:$0x1]
    %280 = vadd.xlane.f32.xlu0 %v216
    %v281 = vpop.xlane.xlu0 %280
    %282 = vadd.xlane.f32.xlu0 %v219
    %v283 = vpop.xlane.xlu0 %282
    %284 = vadd.xlane.f32.xlu0 %v224
    %v285 = vpop.xlane.xlu0 %284
    %286 = vadd.xlane.f32.xlu0 %v227
    %v287 = vpop.xlane.xlu0 %286
    %288 = vadd.xlane.f32.xlu0 %v232
    %v289 = vpop.xlane.xlu0 %288
    %290 = vadd.xlane.f32.xlu0 %v235
    %v291 = vpop.xlane.xlu0 %290
    %292 = vadd.xlane.f32.xlu0 %v240
    %v293 = vpop.xlane.xlu0 %292
    %294 = vadd.xlane.f32.xlu0 %v243
    %v295 = vpop.xlane.xlu0 %294
    %296 = vadd.xlane.f32.xlu0 %v248
    %v297 = vpop.xlane.xlu0 %296
    %298 = vadd.xlane.f32.xlu0 %v251
    %v299 = vpop.xlane.xlu0 %298
    %300 = vadd.xlane.f32.xlu0 %v256
    %v301 = vpop.xlane.xlu0 %300
    %302 = vadd.xlane.f32.xlu0 %v259
    %v303 = vpop.xlane.xlu0 %302
    %304 = vadd.xlane.f32.xlu0 %v264
    %v305 = vpop.xlane.xlu0 %304
    %306 = vadd.xlane.f32.xlu0 %v267
    %v307 = vpop.xlane.xlu0 %306
    %308 = vadd.xlane.f32.xlu0 %v272
    %v309 = vpop.xlane.xlu0 %308
    %310 = vadd.xlane.f32.xlu0 %v275
    %v311 = vpop.xlane.xlu0 %310
    %v312 = vmul.f32 %v216, %v216
    %v313 = vmul.f32 %v219, %v219
    %v314 = vmul.f32 %v224, %v224
    %v315 = vmul.f32 %v227, %v227
    %v316 = vmul.f32 %v232, %v232
    %v317 = vmul.f32 %v235, %v235
    %v318 = vmul.f32 %v240, %v240
    %v319 = vmul.f32 %v243, %v243
    %v320 = vmul.f32 %v248, %v248
    %v321 = vmul.f32 %v251, %v251
    %v322 = vmul.f32 %v256, %v256
    %v323 = vmul.f32 %v259, %v259
    %v324 = vmul.f32 %v264, %v264
    %v325 = vmul.f32 %v267, %v267
    %v326 = vmul.f32 %v272, %v272
    %v327 = vmul.f32 %v275, %v275
    %328 = vadd.xlane.f32.xlu0 %v312
    %v329 = vpop.xlane.xlu0 %328
    %330 = vadd.xlane.f32.xlu0 %v313
    %v331 = vpop.xlane.xlu0 %330
    %332 = vadd.xlane.f32.xlu0 %v314
    %v333 = vpop.xlane.xlu0 %332
    %334 = vadd.xlane.f32.xlu0 %v315
    %v335 = vpop.xlane.xlu0 %334
    %336 = vadd.xlane.f32.xlu0 %v316
    %v337 = vpop.xlane.xlu0 %336
    %338 = vadd.xlane.f32.xlu0 %v317
    %v339 = vpop.xlane.xlu0 %338
    %340 = vadd.xlane.f32.xlu0 %v318
    %v341 = vpop.xlane.xlu0 %340
    %342 = vadd.xlane.f32.xlu0 %v319
    %v343 = vpop.xlane.xlu0 %342
    %344 = vadd.xlane.f32.xlu0 %v320
    %v345 = vpop.xlane.xlu0 %344
    %346 = vadd.xlane.f32.xlu0 %v321
    %v347 = vpop.xlane.xlu0 %346
    %348 = vadd.xlane.f32.xlu0 %v322
    %v349 = vpop.xlane.xlu0 %348
    %350 = vadd.xlane.f32.xlu0 %v323
    %v351 = vpop.xlane.xlu0 %350
    %352 = vadd.xlane.f32.xlu0 %v324
    %v353 = vpop.xlane.xlu0 %352
    %354 = vadd.xlane.f32.xlu0 %v325
    %v355 = vpop.xlane.xlu0 %354
    %356 = vadd.xlane.f32.xlu0 %v326
    %v357 = vpop.xlane.xlu0 %356
    %358 = vadd.xlane.f32.xlu0 %v327
    %v359 = vpop.xlane.xlu0 %358
    %v360 = vmul.f32 %v281, 0.03125
    %v361 = vmul.f32 %v283, 0.03125
    %v362 = vmul.f32 %v285, 0.03125
    %v363 = vmul.f32 %v287, 0.03125
    %v364 = vmul.f32 %v289, 0.03125
    %v365 = vmul.f32 %v291, 0.03125
    %v366 = vmul.f32 %v293, 0.03125
    %v367 = vmul.f32 %v295, 0.03125
    %v368 = vmul.f32 %v297, 0.03125
    %v369 = vmul.f32 %v299, 0.03125
    %v370 = vmul.f32 %v301, 0.03125
    %v371 = vmul.f32 %v303, 0.03125
    %v372 = vmul.f32 %v305, 0.03125
    %v373 = vmul.f32 %v307, 0.03125
    %v374 = vmul.f32 %v309, 0.03125
    %v375 = vmul.f32 %v311, 0.03125
    %v376 = vmul.f32 %v329, 0.03125
    %v377 = vmul.f32 %v331, 0.03125
    %v378 = vmul.f32 %v333, 0.03125
    %v379 = vmul.f32 %v335, 0.03125
    %v380 = vmul.f32 %v337, 0.03125
    %v381 = vmul.f32 %v339, 0.03125
    %v382 = vmul.f32 %v341, 0.03125
    %v383 = vmul.f32 %v343, 0.03125
    %v384 = vmul.f32 %v345, 0.03125
    %v385 = vmul.f32 %v347, 0.03125
    %v386 = vmul.f32 %v349, 0.03125
    %v387 = vmul.f32 %v351, 0.03125
    %v388 = vmul.f32 %v353, 0.03125
    %v389 = vmul.f32 %v355, 0.03125
    %v390 = vmul.f32 %v357, 0.03125
    %v391 = vmul.f32 %v359, 0.03125
    %v392 = vmul.f32 %v360, %v360
    %v393 = vmul.f32 %v361, %v361
    %v394 = vmul.f32 %v362, %v362
    %v395 = vmul.f32 %v363, %v363
    %v396 = vmul.f32 %v364, %v364
    %v397 = vmul.f32 %v365, %v365
    %v398 = vmul.f32 %v366, %v366
    %v399 = vmul.f32 %v367, %v367
    %v400 = vmul.f32 %v368, %v368
    %v401 = vmul.f32 %v369, %v369
    %v402 = vmul.f32 %v370, %v370
    %v403 = vmul.f32 %v371, %v371
    %v404 = vmul.f32 %v372, %v372
    %v405 = vmul.f32 %v373, %v373
    %v406 = vmul.f32 %v374, %v374
    %v407 = vmul.f32 %v375, %v375
    %v408 = vsub.f32 %v376, %v392
    %v409 = vsub.f32 %v377, %v393
    %v410 = vsub.f32 %v378, %v394
    %v411 = vsub.f32 %v379, %v395
    %v412 = vsub.f32 %v380, %v396
    %v413 = vsub.f32 %v381, %v397
    %v414 = vsub.f32 %v382, %v398
    %v415 = vsub.f32 %v383, %v399
    %v416 = vsub.f32 %v384, %v400
    %v417 = vsub.f32 %v385, %v401
    %v418 = vsub.f32 %v386, %v402
    %v419 = vsub.f32 %v387, %v403
    %v420 = vsub.f32 %v388, %v404
    %v421 = vsub.f32 %v389, %v405
    %v422 = vsub.f32 %v390, %v406
    %v423 = vsub.f32 %v391, %v407
    %v424 = vmax.f32 %v408, 0.0
    %v425 = vmax.f32 %v409, 0.0
    %v426 = vmax.f32 %v410, 0.0
    %v427 = vmax.f32 %v411, 0.0
    %v428 = vmax.f32 %v412, 0.0
    %v429 = vmax.f32 %v413, 0.0
    %v430 = vmax.f32 %v414, 0.0
    %v431 = vmax.f32 %v415, 0.0
    %v432 = vmax.f32 %v416, 0.0
    %v433 = vmax.f32 %v417, 0.0
    %v434 = vmax.f32 %v418, 0.0
    %v435 = vmax.f32 %v419, 0.0
    %v436 = vmax.f32 %v420, 0.0
    %v437 = vmax.f32 %v421, 0.0
    %v438 = vmax.f32 %v422, 0.0
    %v439 = vmax.f32 %v423, 0.0
    %v440 = vsub.f32 %v216, %v360
    %v441 = vsub.f32 %v219, %v361
    %v442 = vsub.f32 %v224, %v362
    %v443 = vsub.f32 %v227, %v363
    %v444 = vsub.f32 %v232, %v364
    %v445 = vsub.f32 %v235, %v365
    %v446 = vsub.f32 %v240, %v366
    %v447 = vsub.f32 %v243, %v367
    %v448 = vsub.f32 %v248, %v368
    %v449 = vsub.f32 %v251, %v369
    %v450 = vsub.f32 %v256, %v370
    %v451 = vsub.f32 %v259, %v371
    %v452 = vsub.f32 %v264, %v372
    %v453 = vsub.f32 %v267, %v373
    %v454 = vsub.f32 %v272, %v374
    %v455 = vsub.f32 %v275, %v375
    %v456 = vadd.f32 %v424, 1e-05
    %v457 = vadd.f32 %v425, 1e-05
    %v458 = vadd.f32 %v426, 1e-05
    %v459 = vadd.f32 %v427, 1e-05
    %v460 = vadd.f32 %v428, 1e-05
    %v461 = vadd.f32 %v429, 1e-05
    %v462 = vadd.f32 %v430, 1e-05
    %v463 = vadd.f32 %v431, 1e-05
    %v464 = vadd.f32 %v432, 1e-05
    %v465 = vadd.f32 %v433, 1e-05
    %v466 = vadd.f32 %v434, 1e-05
    %v467 = vadd.f32 %v435, 1e-05
    %v468 = vadd.f32 %v436, 1e-05
    %v469 = vadd.f32 %v437, 1e-05
    %v470 = vadd.f32 %v438, 1e-05
    %v471 = vadd.f32 %v439, 1e-05
    %v472 = vrsqrt.pop %v456
    %v473 = vrsqrt.pop %v457
    %v474 = vrsqrt.pop %v458
    %v475 = vrsqrt.pop %v459
    %v476 = vrsqrt.pop %v460
    %v477 = vrsqrt.pop %v461
    %v478 = vrsqrt.pop %v462
    %v479 = vrsqrt.pop %v463
    %v480 = vrsqrt.pop %v464
    %v481 = vrsqrt.pop %v465
    %v482 = vrsqrt.pop %v466
    %v483 = vrsqrt.pop %v467
    %v484 = vrsqrt.pop %v468
    %v485 = vrsqrt.pop %v469
    %v486 = vrsqrt.pop %v470
    %v487 = vrsqrt.pop %v471
    %v488 = vmul.f32 %v440, %v472
    %v489 = vmul.f32 %v441, %v473
    %v490 = vmul.f32 %v442, %v474
    %v491 = vmul.f32 %v443, %v475
    %v492 = vmul.f32 %v444, %v476
    %v493 = vmul.f32 %v445, %v477
    %v494 = vmul.f32 %v446, %v478
    %v495 = vmul.f32 %v447, %v479
    %v496 = vmul.f32 %v448, %v480
    %v497 = vmul.f32 %v449, %v481
    %v498 = vmul.f32 %v450, %v482
    %v499 = vmul.f32 %v451, %v483
    %v500 = vmul.f32 %v452, %v484
    %v501 = vmul.f32 %v453, %v485
    %v502 = vmul.f32 %v454, %v486
    %v503 = vmul.f32 %v455, %v487
    %v505 = vlaneseq
    %v506 = vshrl.u32 %v505, 7
    %v507 = vsub.s32 0, %v506
    %v508 = vrot.slane %v278, %v507
    %v510 = vmul.f32 %v488, %v508
    %v511 = vmul.f32 %v489, %v508
    %v512 = vmul.f32 %v490, %v508
    %v513 = vmul.f32 %v491, %v508
    %v514 = vmul.f32 %v492, %v508
    %v515 = vmul.f32 %v493, %v508
    %v516 = vmul.f32 %v494, %v508
    %v517 = vmul.f32 %v495, %v508
    %v518 = vmul.f32 %v496, %v508
    %v519 = vmul.f32 %v497, %v508
    %v520 = vmul.f32 %v498, %v508
    %v521 = vmul.f32 %v499, %v508
    %v522 = vmul.f32 %v500, %v508
    %v523 = vmul.f32 %v501, %v508
    %v524 = vmul.f32 %v502, %v508
    %v525 = vmul.f32 %v503, %v508
    %v527 = vlaneseq
    %v528 = vshrl.u32 %v527, 7
    %v529 = vsub.s32 0, %v528
    %v530 = vrot.slane %v279, %v529
    %v532 = vadd.f32 %v510, %v530
    %v533 = vadd.f32 %v511, %v530
    %v534 = vadd.f32 %v512, %v530
    %v535 = vadd.f32 %v513, %v530
    %v536 = vadd.f32 %v514, %v530
    %v537 = vadd.f32 %v515, %v530
    %v538 = vadd.f32 %v516, %v530
    %v539 = vadd.f32 %v517, %v530
    %v540 = vadd.f32 %v518, %v530
    %v541 = vadd.f32 %v519, %v530
    %v542 = vadd.f32 %v520, %v530
    %v543 = vadd.f32 %v521, %v530
    %v544 = vadd.f32 %v522, %v530
    %v545 = vadd.f32 %v523, %v530
    %v546 = vadd.f32 %v524, %v530
    %v547 = vadd.f32 %v525, %v530
    %v548 = vpack.c.bf16 %v533, %v532
    %v549 = vpack.c.bf16 %v535, %v534
    %v550 = vpack.c.bf16 %v537, %v536
    %v551 = vpack.c.bf16 %v539, %v538
    %v552 = vpack.c.bf16 %v541, %v540
    %v553 = vpack.c.bf16 %v543, %v542
    %v554 = vpack.c.bf16 %v545, %v544
    %v555 = vpack.c.bf16 %v547, %v546
    %556 = vst [vmem:[#allocation2] sm:$0xff] %v548
    %557 = vst [vmem:[#allocation2 + $0x8] sm:$0xff] %v549
    %558 = vst [vmem:[#allocation2 + $0x10] sm:$0xff] %v550
    %559 = vst [vmem:[#allocation2 + $0x18] sm:$0xff] %v551
    %560 = vst [vmem:[#allocation2 + $0x20] sm:$0xff] %v552
    %561 = vst [vmem:[#allocation2 + $0x28] sm:$0xff] %v553
    %562 = vst [vmem:[#allocation2 + $0x30] sm:$0xff] %v554
    %563 = vst [vmem:[#allocation2 + $0x38] sm:$0xff] %v555
    %v564 = vld [vmem:[%s5] sm:$0xf]
    %v565 = vld [vmem:[%s5 + $0x4] sm:$0xf]
    %v566 = vld [vmem:[%s5 + $0x8] sm:$0xf]
    %v567 = vld [vmem:[%s5 + $0xc] sm:$0xf]
    %v568 = vld [vmem:[%s5 + $0x10] sm:$0xf]
    %v569 = vld [vmem:[%s5 + $0x14] sm:$0xf]
    %v570 = vld [vmem:[%s5 + $0x18] sm:$0xf]
    %v571 = vld [vmem:[%s5 + $0x1c] sm:$0xf]
    %v572 = vld [vmem:[%s5 + $0x20] sm:$0xf]
    %v573 = vld [vmem:[%s5 + $0x24] sm:$0xf]
    %v574 = vld [vmem:[%s5 + $0x28] sm:$0xf]
    %v575 = vld [vmem:[%s5 + $0x2c] sm:$0xf]
    %v576 = vld [vmem:[%s5 + $0x30] sm:$0xf]
    %v577 = vld [vmem:[%s5 + $0x34] sm:$0xf]
    %v578 = vld [vmem:[%s5 + $0x38] sm:$0xf]
    %v579 = vld [vmem:[%s5 + $0x3c] sm:$0xf]
    %v580 = vld [vmem:[%s6] sm:$0x1]
    %v582 = vlaneseq
    %v583 = vshrl.u32 %v582, 7
    %v584 = vsub.s32 0, %v583
    %v585 = vrot.slane %v580, %v584
    %v587 = vld [vmem:[%s7] sm:$0x1]
    %v589 = vlaneseq
    %v590 = vshrl.u32 %v589, 7
    %v591 = vsub.s32 0, %v590
    %v592 = vrot.slane %v587, %v591
    %v594 = vld [vmem:[%s8] sm:$0x1]
    %v596 = vlaneseq
    %v597 = vshrl.u32 %v596, 7
    %v598 = vsub.s32 0, %v597
    %v599 = vrot.slane %v594, %v598
    %v601 = vld [vmem:[%s9] sm:$0x1]
    %v602 = vmax.f32 %v601, 0.01
    %v603 = vrcp.pop %v602
    %v604 = vmul.f32 -1.0, %v603
    %v605 = vmul.f32 %v604, 1.442695
    %v606 = vpow.pop %v605
    %v607 = vld [vmem:[%s10] sm:$0x1]
    %v608 = vxor.u32 %v607, 2147483648
    %v609 = vmul.f32 %v608, 1.442695
    %v610 = vpow.pop %v609
    %v611 = vadd.f32 %v610, 1.0
    %v612 = vrcp.pop %v611
    %v613 = vmul.f32 1.0, %v612
    %v615 = vlaneseq
    %v616 = vshrl.u32 %v615, 7
    %v617 = vsub.s32 0, %v616
    %v618 = vrot.slane %v606, %v617
    %v620 = vsub.f32 1.0, %v606
    %v622 = vlaneseq
    %v623 = vshrl.u32 %v622, 7
    %v624 = vsub.s32 0, %v623
    %v625 = vrot.slane %v620, %v624
    %v628 = vlaneseq
    %v629 = vshrl.u32 %v628, 7
    %v630 = vsub.s32 0, %v629
    %v631 = vrot.slane %v613, %v630
    %v633 = vsub.f32 1.0, %v613
    %v635 = vlaneseq
    %v636 = vshrl.u32 %v635, 7
    %v637 = vsub.s32 0, %v636
    %v638 = vrot.slane %v633, %v637
    %v640 = vld [vmem:[#allocation3] sm:$0xff]
    %v641 = vld [vmem:[#allocation3 + $0x8] sm:$0xff]
    %v642 = vld [vmem:[#allocation4] sm:$0xff]
    %v643 = vld [vmem:[#allocation4 + $0x8] sm:$0xff]
    %v644 = vld [vmem:[#allocation5] sm:$0xff]
    %v645 = vld [vmem:[#allocation6] sm:$0xff]
    %v646 = vld [vmem:[#allocation6 + $0x8] sm:$0xff]
    %v647 = vld [vmem:[#allocation2] sm:$0xff]
    %v648 = vunpack.c.l.bf16 %v647
    %v649 = vunpack.c.h.bf16 %v647
    %v666 = vunpack.c.l.b16 %v564
    %v667 = vunpack.c.l.b16 %v565
    %v668 = vunpack.c.l.b16 %v566
    %v669 = vunpack.c.l.b16 %v567
    %v670 = vunpack.c.l.b16 %v568
    %v671 = vunpack.c.l.b16 %v569
    %v672 = vunpack.c.l.b16 %v570
    %v673 = vunpack.c.l.b16 %v571
    %v674 = vunpack.c.l.b16 %v572
    %v675 = vunpack.c.l.b16 %v573
    %v676 = vunpack.c.l.b16 %v574
    %v677 = vunpack.c.l.b16 %v575
    %v678 = vunpack.c.l.b16 %v576
    %v679 = vunpack.c.l.b16 %v577
    %v680 = vunpack.c.l.b16 %v578
    %v681 = vunpack.c.l.b16 %v579
    %v682 = vpack.c.b16 %v667, %v666
    %v683 = vpack.c.b16 %v669, %v668
    %v684 = vpack.c.b16 %v671, %v670
    %v685 = vpack.c.b16 %v673, %v672
    %v686 = vpack.c.b16 %v675, %v674
    %v687 = vpack.c.b16 %v677, %v676
    %v688 = vpack.c.b16 %v679, %v678
    %v689 = vpack.c.b16 %v681, %v680
    %698 = vmatprep.subr.bf16.mxu0 0
    %699 = vmatpush1.bf16.msra.mxu0 %v682
    %700 = vmatprep.subr.bf16.mxu0 0
    %701 = vmatpush1.bf16.msra.mxu0 %v683
    %702 = vmatprep.subr.bf16.mxu0 0
    %703 = vmatpush1.bf16.msra.mxu0 %v684
    %704 = vmatprep.subr.bf16.mxu0 0
    %705 = vmatpush1.bf16.msra.mxu0 %v685
    %706 = vmatprep.subr.bf16.mxu0 0
    %707 = vmatpush1.bf16.msra.mxu0 %v686
    %708 = vmatprep.subr.bf16.mxu0 0
    %709 = vmatpush1.bf16.msra.mxu0 %v687
    %710 = vmatprep.subr.bf16.mxu0 0
    %711 = vmatpush1.bf16.msra.mxu0 %v688
    %712 = vmatprep.subr.bf16.mxu0 0
    %713 = vmatpush1.bf16.msra.mxu0 %v689
    %714 = vmatprep.subr.bf16.mxu0 0
    %715 = vmatpush1.bf16.msra.mxu0 0
    %716 = vmatprep.subr.bf16.mxu0 0
    %717 = vmatpush1.bf16.msra.mxu0 0
    %718 = vmatprep.subr.bf16.mxu0 0
    %719 = vmatpush1.bf16.msra.mxu0 0
    %720 = vmatprep.subr.bf16.mxu0 0
    %721 = vmatpush1.bf16.msra.mxu0 0
    %722 = vmatprep.subr.bf16.mxu0 0
    %723 = vmatpush1.bf16.msra.mxu0 0
    %724 = vmatprep.subr.bf16.mxu0 0
    %725 = vmatpush1.bf16.msra.mxu0 0
    %726 = vmatprep.subr.bf16.mxu0 0
    %727 = vmatpush1.bf16.msra.mxu0 0
    %728 = vmatprep.subr.bf16.mxu0 0
    %729 = vmatpush1.bf16.msra.mxu0 0
    %730 = vmatprep.mubr.bf16.mxu0 0
    %731 = vmatmul.mubr.bf16.gmra.mrb[0].mxu0 %v644
    %v732 = vpop.f32.mrb[0].mxu0
    %v733 = vadd.f32 %v585, %v732
    %v734 = vpop.f32.mrb[0].mxu0
    %v735 = vpop.f32.mrb[0].mxu0
    %v736 = vadd.f32 %v585, %v735
    %v737 = vpop.f32.mrb[0].mxu0
    %738 = vdwg.mxu0
    %739 = vadd.xlane.f32.xlu0 %v733
    %v740 = vpop.xlane.xlu0 %739
    %741 = vadd.xlane.f32.xlu0 %v736
    %v742 = vpop.xlane.xlu0 %741
    %v743 = vmul.f32 %v733, %v733
    %v744 = vmul.f32 %v736, %v736
    %745 = vadd.xlane.f32.xlu0 %v743
    %v746 = vpop.xlane.xlu0 %745
    %747 = vadd.xlane.f32.xlu0 %v744
    %v748 = vpop.xlane.xlu0 %747
    %v749 = vmul.f32 %v740, 0.03125
    %v750 = vmul.f32 %v742, 0.03125
    %v751 = vmul.f32 %v746, 0.03125
    %v752 = vmul.f32 %v748, 0.03125
    %v753 = vmul.f32 %v749, %v749
    %v754 = vmul.f32 %v750, %v750
    %v755 = vsub.f32 %v751, %v753
    %v756 = vsub.f32 %v752, %v754
    %v757 = vmax.f32 %v755, 0.0
    %v758 = vmax.f32 %v756, 0.0
    %v759 = vsub.f32 %v733, %v749
    %v760 = vsub.f32 %v736, %v750
    %v761 = vadd.f32 %v757, 1e-05
    %v762 = vadd.f32 %v758, 1e-05
    %v763 = vrsqrt.pop %v761
    %v764 = vrsqrt.pop %v762
    %v765 = vmul.f32 %v759, %v763
    %v766 = vmul.f32 %v760, %v764
    %v767 = vmul.f32 %v765, %v592
    %v768 = vmul.f32 %v766, %v592
    %v769 = vadd.f32 %v767, %v599
    %v770 = vadd.f32 %v768, %v599
    %v771 = vadd.f32 %v648, %v769
    %v772 = vadd.f32 %v649, %v770
    %v773 = vmul.f32 %v631, %v642
    %v774 = vmul.f32 %v631, %v643
    %v775 = vmul.f32 %v638, %v771
    %v776 = vmul.f32 %v638, %v772
    %v777 = vadd.f32 %v773, %v775
    %v778 = vadd.f32 %v774, %v776
    %v779 = vmul.f32 %v618, %v640
    %v780 = vmul.f32 %v618, %v641
    %v781 = vmul.f32 %v625, %v777
    %v782 = vmul.f32 %v625, %v778
    %v783 = vadd.f32 %v779, %v781
    %v784 = vadd.f32 %v780, %v782
    %v785 = vsub.f32 %v783, 0.5
    %v786 = vsub.f32 %v784, 0.5
    %vm787 = vcmp.gt.f32.partialorder %v785, 0.0
    %vm788 = vcmp.gt.f32.partialorder %v786, 0.0
    %v789 = vsel %vm787, 1, 0
    %v790 = vsel %vm788, 1, 0
    %v791 = vcvt.s32.f32 %v789
    %v792 = vcvt.s32.f32 %v790
    %v793 = vpack.c.bf16 %v792, %v791
    %v795 = vunpack.c.l.b16 %v793
    %v796 = vunpack.c.h.b16 %v793
    %v797 = vpack.c.b16 %v795, %v795
    %v798 = vpack.c.b16 %v796, %v796
    %801 = vst [vmem:[#allocation11] sm:$0xf] %v797
    %802 = vst [vmem:[#allocation11 + $0x4] sm:$0xf] %v798
    %v803 = vadd.f32 %v645, %v791
    %v804 = vadd.f32 %v646, %v792
    %s805 = scalar_lea.vmem [#allocation2], 8
    %v806 = vld [vmem:[%s805] sm:$0xff]
    %v807 = vunpack.c.l.bf16 %v806
    %v808 = vunpack.c.h.bf16 %v806
    %809 = vmatprep.subr.bf16.mxu0 0
    %810 = vmatpush1.bf16.msra.mxu0 %v682
    %811 = vmatprep.subr.bf16.mxu0 0
    %812 = vmatpush1.bf16.msra.mxu0 %v683
    %813 = vmatprep.subr.bf16.mxu0 0
    %814 = vmatpush1.bf16.msra.mxu0 %v684
    %815 = vmatprep.subr.bf16.mxu0 0
    %816 = vmatpush1.bf16.msra.mxu0 %v685
    %817 = vmatprep.subr.bf16.mxu0 0
    %818 = vmatpush1.bf16.msra.mxu0 %v686
    %819 = vmatprep.subr.bf16.mxu0 0
    %820 = vmatpush1.bf16.msra.mxu0 %v687
    %821 = vmatprep.subr.bf16.mxu0 0
    %822 = vmatpush1.bf16.msra.mxu0 %v688
    %823 = vmatprep.subr.bf16.mxu0 0
    %824 = vmatpush1.bf16.msra.mxu0 %v689
    %825 = vmatprep.subr.bf16.mxu0 0
    %826 = vmatpush1.bf16.msra.mxu0 0
    %827 = vmatprep.subr.bf16.mxu0 0
    %828 = vmatpush1.bf16.msra.mxu0 0
    %829 = vmatprep.subr.bf16.mxu0 0
    %830 = vmatpush1.bf16.msra.mxu0 0
    %831 = vmatprep.subr.bf16.mxu0 0
    %832 = vmatpush1.bf16.msra.mxu0 0
    %833 = vmatprep.subr.bf16.mxu0 0
    %834 = vmatpush1.bf16.msra.mxu0 0
    %835 = vmatprep.subr.bf16.mxu0 0
    %836 = vmatpush1.bf16.msra.mxu0 0
    %837 = vmatprep.subr.bf16.mxu0 0
    %838 = vmatpush1.bf16.msra.mxu0 0
    %839 = vmatprep.subr.bf16.mxu0 0
    %840 = vmatpush1.bf16.msra.mxu0 0
    %841 = vmatprep.mubr.bf16.mxu0 0
    %842 = vmatmul.mubr.bf16.gmra.mrb[0].mxu0 %v793
    %v843 = vpop.f32.mrb[0].mxu0
    %v844 = vadd.f32 %v585, %v843
    %v845 = vpop.f32.mrb[0].mxu0
    %v846 = vpop.f32.mrb[0].mxu0
    %v847 = vadd.f32 %v585, %v846
    %v848 = vpop.f32.mrb[0].mxu0
    %849 = vdwg.mxu0
    %850 = vadd.xlane.f32.xlu0 %v844
    %v851 = vpop.xlane.xlu0 %850
    %852 = vadd.xlane.f32.xlu0 %v847
    %v853 = vpop.xlane.xlu0 %852
    %v854 = vmul.f32 %v844, %v844
    %v855 = vmul.f32 %v847, %v847
    %856 = vadd.xlane.f32.xlu0 %v854
    %v857 = vpop.xlane.xlu0 %856
    %858 = vadd.xlane.f32.xlu0 %v855
    %v859 = vpop.xlane.xlu0 %858
    %v860 = vmul.f32 %v851, 0.03125
    %v861 = vmul.f32 %v853, 0.03125
    %v862 = vmul.f32 %v857, 0.03125
    %v863 = vmul.f32 %v859, 0.03125
    %v864 = vmul.f32 %v860, %v860
    %v865 = vmul.f32 %v861, %v861
    %v866 = vsub.f32 %v862, %v864
    %v867 = vsub.f32 %v863, %v865
    %v868 = vmax.f32 %v866, 0.0
    %v869 = vmax.f32 %v867, 0.0
    %v870 = vsub.f32 %v844, %v860
    %v871 = vsub.f32 %v847, %v861
    %v872 = vadd.f32 %v868, 1e-05
    %v873 = vadd.f32 %v869, 1e-05
    %v874 = vrsqrt.pop %v872
    %v875 = vrsqrt.pop %v873
    %v876 = vmul.f32 %v870, %v874
    %v877 = vmul.f32 %v871, %v875
    %v878 = vmul.f32 %v876, %v592
    %v879 = vmul.f32 %v877, %v592
    %v880 = vadd.f32 %v878, %v599
    %v881 = vadd.f32 %v879, %v599
    %v882 = vadd.f32 %v807, %v880
    %v883 = vadd.f32 %v808, %v881
    %v884 = vmul.f32 %v631, %v777
    %v885 = vmul.f32 %v631, %v778
    %v886 = vmul.f32 %v638, %v882
    %v887 = vmul.f32 %v638, %v883
    %v888 = vadd.f32 %v884, %v886
    %v889 = vadd.f32 %v885, %v887
    %v890 = vmul.f32 %v618, %v783
    %v891 = vmul.f32 %v618, %v784
    %v892 = vmul.f32 %v625, %v888
    %v893 = vmul.f32 %v625, %v889
    %v894 = vadd.f32 %v890, %v892
    %v895 = vadd.f32 %v891, %v893
    %v896 = vsub.f32 %v894, 0.5
    %v897 = vsub.f32 %v895, 0.5
    %vm898 = vcmp.gt.f32.partialorder %v896, 0.0
    %vm899 = vcmp.gt.f32.partialorder %v897, 0.0
    %v900 = vsel %vm898, 1, 0
    %v901 = vsel %vm899, 1, 0
    %v902 = vcvt.s32.f32 %v900
    %v903 = vcvt.s32.f32 %v901
    %v904 = vpack.c.bf16 %v903, %v902
    %v906 = vunpack.c.l.b16 %v904
    %v907 = vunpack.c.h.b16 %v904
    %v908 = vpack.c.b16 %v906, %v906
    %v909 = vpack.c.b16 %v907, %v907
    %s912 = scalar_lea.vmem [#allocation11], 8
    %913 = vst [vmem:[%s912] sm:$0xf] %v908
    %914 = vst [vmem:[%s912 + $0x4] sm:$0xf] %v909
    %v915 = vadd.f32 %v803, %v902
    %v916 = vadd.f32 %v804, %v903
    %s917 = scalar_lea.vmem [#allocation2], 16
    %v918 = vld [vmem:[%s917] sm:$0xff]
    %v919 = vunpack.c.l.bf16 %v918
    %v920 = vunpack.c.h.bf16 %v918
    %921 = vmatprep.subr.bf16.mxu0 0
    %922 = vmatpush1.bf16.msra.mxu0 %v682
    %923 = vmatprep.subr.bf16.mxu0 0
    %924 = vmatpush1.bf16.msra.mxu0 %v683
    %925 = vmatprep.subr.bf16.mxu0 0
    %926 = vmatpush1.bf16.msra.mxu0 %v684
    %927 = vmatprep.subr.bf16.mxu0 0
    %928 = vmatpush1.bf16.msra.mxu0 %v685
    %929 = vmatprep.subr.bf16.mxu0 0
    %930 = vmatpush1.bf16.msra.mxu0 %v686
    %931 = vmatprep.subr.bf16.mxu0 0
    %932 = vmatpush1.bf16.msra.mxu0 %v687
    %933 = vmatprep.subr.bf16.mxu0 0
    %934 = vmatpush1.bf16.msra.mxu0 %v688
    %935 = vmatprep.subr.bf16.mxu0 0
    %936 = vmatpush1.bf16.msra.mxu0 %v689
    %937 = vmatprep.subr.bf16.mxu0 0
    %938 = vmatpush1.bf16.msra.mxu0 0
    %939 = vmatprep.subr.bf16.mxu0 0
    %940 = vmatpush1.bf16.msra.mxu0 0
    %941 = vmatprep.subr.bf16.mxu0 0
    %942 = vmatpush1.bf16.msra.mxu0 0
    %943 = vmatprep.subr.bf16.mxu0 0
    %944 = vmatpush1.bf16.msra.mxu0 0
    %945 = vmatprep.subr.bf16.mxu0 0
    %946 = vmatpush1.bf16.msra.mxu0 0
    %947 = vmatprep.subr.bf16.mxu0 0
    %948 = vmatpush1.bf16.msra.mxu0 0
    %949 = vmatprep.subr.bf16.mxu0 0
    %950 = vmatpush1.bf16.msra.mxu0 0
    %951 = vmatprep.subr.bf16.mxu0 0
    %952 = vmatpush1.bf16.msra.mxu0 0
    %953 = vmatprep.mubr.bf16.mxu0 0
    %954 = vmatmul.mubr.bf16.gmra.mrb[0].mxu0 %v904
    %v955 = vpop.f32.mrb[0].mxu0
    %v956 = vadd.f32 %v585, %v955
    %v957 = vpop.f32.mrb[0].mxu0
    %v958 = vpop.f32.mrb[0].mxu0
    %v959 = vadd.f32 %v585, %v958
    %v960 = vpop.f32.mrb[0].mxu0
    %961 = vdwg.mxu0
    %962 = vadd.xlane.f32.xlu0 %v956
    %v963 = vpop.xlane.xlu0 %962
    %964 = vadd.xlane.f32.xlu0 %v959
    %v965 = vpop.xlane.xlu0 %964
    %v966 = vmul.f32 %v956, %v956
    %v967 = vmul.f32 %v959, %v959
    %968 = vadd.xlane.f32.xlu0 %v966
    %v969 = vpop.xlane.xlu0 %968
    %970 = vadd.xlane.f32.xlu0 %v967
    %v971 = vpop.xlane.xlu0 %970
    %v972 = vmul.f32 %v963, 0.03125
    %v973 = vmul.f32 %v965, 0.03125
    %v974 = vmul.f32 %v969, 0.03125
    %v975 = vmul.f32 %v971, 0.03125
    %v976 = vmul.f32 %v972, %v972
    %v977 = vmul.f32 %v973, %v973
    %v978 = vsub.f32 %v974, %v976
    %v979 = vsub.f32 %v975, %v977
    %v980 = vmax.f32 %v978, 0.0
    %v981 = vmax.f32 %v979, 0.0
    %v982 = vsub.f32 %v956, %v972
    %v983 = vsub.f32 %v959, %v973
    %v984 = vadd.f32 %v980, 1e-05
    %v985 = vadd.f32 %v981, 1e-05
    %v986 = vrsqrt.pop %v984
    %v987 = vrsqrt.pop %v985
    %v988 = vmul.f32 %v982, %v986
    %v989 = vmul.f32 %v983, %v987
    %v990 = vmul.f32 %v988, %v592
    %v991 = vmul.f32 %v989, %v592
    %v992 = vadd.f32 %v990, %v599
    %v993 = vadd.f32 %v991, %v599
    %v994 = vadd.f32 %v919, %v992
    %v995 = vadd.f32 %v920, %v993
    %v996 = vmul.f32 %v631, %v888
    %v997 = vmul.f32 %v631, %v889
    %v998 = vmul.f32 %v638, %v994
    %v999 = vmul.f32 %v638, %v995
    %v1000 = vadd.f32 %v996, %v998
    %v1001 = vadd.f32 %v997, %v999
    %v1002 = vmul.f32 %v618, %v894
    %v1003 = vmul.f32 %v618, %v895
    %v1004 = vmul.f32 %v625, %v1000
    %v1005 = vmul.f32 %v625, %v1001
    %v1006 = vadd.f32 %v1002, %v1004
    %v1007 = vadd.f32 %v1003, %v1005
    %v1008 = vsub.f32 %v1006, 0.5
    %v1009 = vsub.f32 %v1007, 0.5
    %vm1010 = vcmp.gt.f32.partialorder %v1008, 0.0
    %vm1011 = vcmp.gt.f32.partialorder %v1009, 0.0
    %v1012 = vsel %vm1010, 1, 0
    %v1013 = vsel %vm1011, 1, 0
    %v1014 = vcvt.s32.f32 %v1012
    %v1015 = vcvt.s32.f32 %v1013
    %v1016 = vpack.c.bf16 %v1015, %v1014
    %v1018 = vunpack.c.l.b16 %v1016
    %v1019 = vunpack.c.h.b16 %v1016
    %v1020 = vpack.c.b16 %v1018, %v1018
    %v1021 = vpack.c.b16 %v1019, %v1019
    %s1024 = scalar_lea.vmem [#allocation11], 16
    %1025 = vst [vmem:[%s1024] sm:$0xf] %v1020
    %1026 = vst [vmem:[%s1024 + $0x4] sm:$0xf] %v1021
    %v1027 = vadd.f32 %v915, %v1014
    %v1028 = vadd.f32 %v916, %v1015
    %s1029 = scalar_lea.vmem [#allocation2], 24
    %v1030 = vld [vmem:[%s1029] sm:$0xff]
    %v1031 = vunpack.c.l.bf16 %v1030
    %v1032 = vunpack.c.h.bf16 %v1030
    %1033 = vmatprep.subr.bf16.mxu0 0
    %1034 = vmatpush1.bf16.msra.mxu0 %v682
    %1035 = vmatprep.subr.bf16.mxu0 0
    %1036 = vmatpush1.bf16.msra.mxu0 %v683
    %1037 = vmatprep.subr.bf16.mxu0 0
    %1038 = vmatpush1.bf16.msra.mxu0 %v684
    %1039 = vmatprep.subr.bf16.mxu0 0
    %1040 = vmatpush1.bf16.msra.mxu0 %v685
    %1041 = vmatprep.subr.bf16.mxu0 0
    %1042 = vmatpush1.bf16.msra.mxu0 %v686
    %1043 = vmatprep.subr.bf16.mxu0 0
    %1044 = vmatpush1.bf16.msra.mxu0 %v687
    %1045 = vmatprep.subr.bf16.mxu0 0
    %1046 = vmatpush1.bf16.msra.mxu0 %v688
    %1047 = vmatprep.subr.bf16.mxu0 0
    %1048 = vmatpush1.bf16.msra.mxu0 %v689
    %1049 = vmatprep.subr.bf16.mxu0 0
    %1050 = vmatpush1.bf16.msra.mxu0 0
    %1051 = vmatprep.subr.bf16.mxu0 0
    %1052 = vmatpush1.bf16.msra.mxu0 0
    %1053 = vmatprep.subr.bf16.mxu0 0
    %1054 = vmatpush1.bf16.msra.mxu0 0
    %1055 = vmatprep.subr.bf16.mxu0 0
    %1056 = vmatpush1.bf16.msra.mxu0 0
    %1057 = vmatprep.subr.bf16.mxu0 0
    %1058 = vmatpush1.bf16.msra.mxu0 0
    %1059 = vmatprep.subr.bf16.mxu0 0
    %1060 = vmatpush1.bf16.msra.mxu0 0
    %1061 = vmatprep.subr.bf16.mxu0 0
    %1062 = vmatpush1.bf16.msra.mxu0 0
    %1063 = vmatprep.subr.bf16.mxu0 0
    %1064 = vmatpush1.bf16.msra.mxu0 0
    %1065 = vmatprep.mubr.bf16.mxu0 0
    %1066 = vmatmul.mubr.bf16.gmra.mrb[0].mxu0 %v1016
    %v1067 = vpop.f32.mrb[0].mxu0
    %v1068 = vadd.f32 %v585, %v1067
    %v1069 = vpop.f32.mrb[0].mxu0
    %v1070 = vpop.f32.mrb[0].mxu0
    %v1071 = vadd.f32 %v585, %v1070
    %v1072 = vpop.f32.mrb[0].mxu0
    %1073 = vdwg.mxu0
    %1074 = vadd.xlane.f32.xlu0 %v1068
    %v1075 = vpop.xlane.xlu0 %1074
    %1076 = vadd.xlane.f32.xlu0 %v1071
    %v1077 = vpop.xlane.xlu0 %1076
    %v1078 = vmul.f32 %v1068, %v1068
    %v1079 = vmul.f32 %v1071, %v1071
    %1080 = vadd.xlane.f32.xlu0 %v1078
    %v1081 = vpop.xlane.xlu0 %1080
    %1082 = vadd.xlane.f32.xlu0 %v1079
    %v1083 = vpop.xlane.xlu0 %1082
    %v1084 = vmul.f32 %v1075, 0.03125
    %v1085 = vmul.f32 %v1077, 0.03125
    %v1086 = vmul.f32 %v1081, 0.03125
    %v1087 = vmul.f32 %v1083, 0.03125
    %v1088 = vmul.f32 %v1084, %v1084
    %v1089 = vmul.f32 %v1085, %v1085
    %v1090 = vsub.f32 %v1086, %v1088
    %v1091 = vsub.f32 %v1087, %v1089
    %v1092 = vmax.f32 %v1090, 0.0
    %v1093 = vmax.f32 %v1091, 0.0
    %v1094 = vsub.f32 %v1068, %v1084
    %v1095 = vsub.f32 %v1071, %v1085
    %v1096 = vadd.f32 %v1092, 1e-05
    %v1097 = vadd.f32 %v1093, 1e-05
    %v1098 = vrsqrt.pop %v1096
    %v1099 = vrsqrt.pop %v1097
    %v1100 = vmul.f32 %v1094, %v1098
    %v1101 = vmul.f32 %v1095, %v1099
    %v1102 = vmul.f32 %v1100, %v592
    %v1103 = vmul.f32 %v1101, %v592
    %v1104 = vadd.f32 %v1102, %v599
    %v1105 = vadd.f32 %v1103, %v599
    %v1106 = vadd.f32 %v1031, %v1104
    %v1107 = vadd.f32 %v1032, %v1105
    %v1108 = vmul.f32 %v631, %v1000
    %v1109 = vmul.f32 %v631, %v1001
    %v1110 = vmul.f32 %v638, %v1106
    %v1111 = vmul.f32 %v638, %v1107
    %v1112 = vadd.f32 %v1108, %v1110
    %v1113 = vadd.f32 %v1109, %v1111
    %v1114 = vmul.f32 %v618, %v1006
    %v1115 = vmul.f32 %v618, %v1007
    %v1116 = vmul.f32 %v625, %v1112
    %v1117 = vmul.f32 %v625, %v1113
    %v1118 = vadd.f32 %v1114, %v1116
    %v1119 = vadd.f32 %v1115, %v1117
    %v1120 = vsub.f32 %v1118, 0.5
    %v1121 = vsub.f32 %v1119, 0.5
    %vm1122 = vcmp.gt.f32.partialorder %v1120, 0.0
    %vm1123 = vcmp.gt.f32.partialorder %v1121, 0.0
    %v1124 = vsel %vm1122, 1, 0
    %v1125 = vsel %vm1123, 1, 0
    %v1126 = vcvt.s32.f32 %v1124
    %v1127 = vcvt.s32.f32 %v1125
    %v1128 = vpack.c.bf16 %v1127, %v1126
    %v1130 = vunpack.c.l.b16 %v1128
    %v1131 = vunpack.c.h.b16 %v1128
    %v1132 = vpack.c.b16 %v1130, %v1130
    %v1133 = vpack.c.b16 %v1131, %v1131
    %s1136 = scalar_lea.vmem [#allocation11], 24
    %1137 = vst [vmem:[%s1136] sm:$0xf] %v1132
    %1138 = vst [vmem:[%s1136 + $0x4] sm:$0xf] %v1133
    %v1139 = vadd.f32 %v1027, %v1126
    %v1140 = vadd.f32 %v1028, %v1127
    %s1141 = scalar_lea.vmem [#allocation2], 32
    %v1142 = vld [vmem:[%s1141] sm:$0xff]
    %v1143 = vunpack.c.l.bf16 %v1142
    %v1144 = vunpack.c.h.bf16 %v1142
    %1145 = vmatprep.subr.bf16.mxu0 0
    %1146 = vmatpush1.bf16.msra.mxu0 %v682
    %1147 = vmatprep.subr.bf16.mxu0 0
    %1148 = vmatpush1.bf16.msra.mxu0 %v683
    %1149 = vmatprep.subr.bf16.mxu0 0
    %1150 = vmatpush1.bf16.msra.mxu0 %v684
    %1151 = vmatprep.subr.bf16.mxu0 0
    %1152 = vmatpush1.bf16.msra.mxu0 %v685
    %1153 = vmatprep.subr.bf16.mxu0 0
    %1154 = vmatpush1.bf16.msra.mxu0 %v686
    %1155 = vmatprep.subr.bf16.mxu0 0
    %1156 = vmatpush1.bf16.msra.mxu0 %v687
    %1157 = vmatprep.subr.bf16.mxu0 0
    %1158 = vmatpush1.bf16.msra.mxu0 %v688
    %1159 = vmatprep.subr.bf16.mxu0 0
    %1160 = vmatpush1.bf16.msra.mxu0 %v689
    %1161 = vmatprep.subr.bf16.mxu0 0
    %1162 = vmatpush1.bf16.msra.mxu0 0
    %1163 = vmatprep.subr.bf16.mxu0 0
    %1164 = vmatpush1.bf16.msra.mxu0 0
    %1165 = vmatprep.subr.bf16.mxu0 0
    %1166 = vmatpush1.bf16.msra.mxu0 0
    %1167 = vmatprep.subr.bf16.mxu0 0
    %1168 = vmatpush1.bf16.msra.mxu0 0
    %1169 = vmatprep.subr.bf16.mxu0 0
    %1170 = vmatpush1.bf16.msra.mxu0 0
    %1171 = vmatprep.subr.bf16.mxu0 0
    %1172 = vmatpush1.bf16.msra.mxu0 0
    %1173 = vmatprep.subr.bf16.mxu0 0
    %1174 = vmatpush1.bf16.msra.mxu0 0
    %1175 = vmatprep.subr.bf16.mxu0 0
    %1176 = vmatpush1.bf16.msra.mxu0 0
    %1177 = vmatprep.mubr.bf16.mxu0 0
    %1178 = vmatmul.mubr.bf16.gmra.mrb[0].mxu0 %v1128
    %v1179 = vpop.f32.mrb[0].mxu0
    %v1180 = vadd.f32 %v585, %v1179
    %v1181 = vpop.f32.mrb[0].mxu0
    %v1182 = vpop.f32.mrb[0].mxu0
    %v1183 = vadd.f32 %v585, %v1182
    %v1184 = vpop.f32.mrb[0].mxu0
    %1185 = vdwg.mxu0
    %1186 = vadd.xlane.f32.xlu0 %v1180
    %v1187 = vpop.xlane.xlu0 %1186
    %1188 = vadd.xlane.f32.xlu0 %v1183
    %v1189 = vpop.xlane.xlu0 %1188
    %v1190 = vmul.f32 %v1180, %v1180
    %v1191 = vmul.f32 %v1183, %v1183
    %1192 = vadd.xlane.f32.xlu0 %v1190
    %v1193 = vpop.xlane.xlu0 %1192
    %1194 = vadd.xlane.f32.xlu0 %v1191
    %v1195 = vpop.xlane.xlu0 %1194
    %v1196 = vmul.f32 %v1187, 0.03125
    %v1197 = vmul.f32 %v1189, 0.03125
    %v1198 = vmul.f32 %v1193, 0.03125
    %v1199 = vmul.f32 %v1195, 0.03125
    %v1200 = vmul.f32 %v1196, %v1196
    %v1201 = vmul.f32 %v1197, %v1197
    %v1202 = vsub.f32 %v1198, %v1200
    %v1203 = vsub.f32 %v1199, %v1201
    %v1204 = vmax.f32 %v1202, 0.0
    %v1205 = vmax.f32 %v1203, 0.0
    %v1206 = vsub.f32 %v1180, %v1196
    %v1207 = vsub.f32 %v1183, %v1197
    %v1208 = vadd.f32 %v1204, 1e-05
    %v1209 = vadd.f32 %v1205, 1e-05
    %v1210 = vrsqrt.pop %v1208
    %v1211 = vrsqrt.pop %v1209
    %v1212 = vmul.f32 %v1206, %v1210
    %v1213 = vmul.f32 %v1207, %v1211
    %v1214 = vmul.f32 %v1212, %v592
    %v1215 = vmul.f32 %v1213, %v592
    %v1216 = vadd.f32 %v1214, %v599
    %v1217 = vadd.f32 %v1215, %v599
    %v1218 = vadd.f32 %v1143, %v1216
    %v1219 = vadd.f32 %v1144, %v1217
    %v1220 = vmul.f32 %v631, %v1112
    %v1221 = vmul.f32 %v631, %v1113
    %v1222 = vmul.f32 %v638, %v1218
    %v1223 = vmul.f32 %v638, %v1219
    %v1224 = vadd.f32 %v1220, %v1222
    %v1225 = vadd.f32 %v1221, %v1223
    %v1226 = vmul.f32 %v618, %v1118
    %v1227 = vmul.f32 %v618, %v1119
    %v1228 = vmul.f32 %v625, %v1224
    %v1229 = vmul.f32 %v625, %v1225
    %v1230 = vadd.f32 %v1226, %v1228
    %v1231 = vadd.f32 %v1227, %v1229
    %v1232 = vsub.f32 %v1230, 0.5
    %v1233 = vsub.f32 %v1231, 0.5
    %vm1234 = vcmp.gt.f32.partialorder %v1232, 0.0
    %vm1235 = vcmp.gt.f32.partialorder %v1233, 0.0
    %v1236 = vsel %vm1234, 1, 0
    %v1237 = vsel %vm1235, 1, 0
    %v1238 = vcvt.s32.f32 %v1236
    %v1239 = vcvt.s32.f32 %v1237
    %v1240 = vpack.c.bf16 %v1239, %v1238
    %v1242 = vunpack.c.l.b16 %v1240
    %v1243 = vunpack.c.h.b16 %v1240
    %v1244 = vpack.c.b16 %v1242, %v1242
    %v1245 = vpack.c.b16 %v1243, %v1243
    %s1248 = scalar_lea.vmem [#allocation11], 32
    %1249 = vst [vmem:[%s1248] sm:$0xf] %v1244
    %1250 = vst [vmem:[%s1248 + $0x4] sm:$0xf] %v1245
    %v1251 = vadd.f32 %v1139, %v1238
    %v1252 = vadd.f32 %v1140, %v1239
    %s1253 = scalar_lea.vmem [#allocation2], 40
    %v1254 = vld [vmem:[%s1253] sm:$0xff]
    %v1255 = vunpack.c.l.bf16 %v1254
    %v1256 = vunpack.c.h.bf16 %v1254
    %1257 = vmatprep.subr.bf16.mxu0 0
    %1258 = vmatpush1.bf16.msra.mxu0 %v682
    %1259 = vmatprep.subr.bf16.mxu0 0
    %1260 = vmatpush1.bf16.msra.mxu0 %v683
    %1261 = vmatprep.subr.bf16.mxu0 0
    %1262 = vmatpush1.bf16.msra.mxu0 %v684
    %1263 = vmatprep.subr.bf16.mxu0 0
    %1264 = vmatpush1.bf16.msra.mxu0 %v685
    %1265 = vmatprep.subr.bf16.mxu0 0
    %1266 = vmatpush1.bf16.msra.mxu0 %v686
    %1267 = vmatprep.subr.bf16.mxu0 0
    %1268 = vmatpush1.bf16.msra.mxu0 %v687
    %1269 = vmatprep.subr.bf16.mxu0 0
    %1270 = vmatpush1.bf16.msra.mxu0 %v688
    %1271 = vmatprep.subr.bf16.mxu0 0
    %1272 = vmatpush1.bf16.msra.mxu0 %v689
    %1273 = vmatprep.subr.bf16.mxu0 0
    %1274 = vmatpush1.bf16.msra.mxu0 0
    %1275 = vmatprep.subr.bf16.mxu0 0
    %1276 = vmatpush1.bf16.msra.mxu0 0
    %1277 = vmatprep.subr.bf16.mxu0 0
    %1278 = vmatpush1.bf16.msra.mxu0 0
    %1279 = vmatprep.subr.bf16.mxu0 0
    %1280 = vmatpush1.bf16.msra.mxu0 0
    %1281 = vmatprep.subr.bf16.mxu0 0
    %1282 = vmatpush1.bf16.msra.mxu0 0
    %1283 = vmatprep.subr.bf16.mxu0 0
    %1284 = vmatpush1.bf16.msra.mxu0 0
    %1285 = vmatprep.subr.bf16.mxu0 0
    %1286 = vmatpush1.bf16.msra.mxu0 0
    %1287 = vmatprep.subr.bf16.mxu0 0
    %1288 = vmatpush1.bf16.msra.mxu0 0
    %1289 = vmatprep.mubr.bf16.mxu0 0
    %1290 = vmatmul.mubr.bf16.gmra.mrb[0].mxu0 %v1240
    %v1291 = vpop.f32.mrb[0].mxu0
    %v1292 = vadd.f32 %v585, %v1291
    %v1293 = vpop.f32.mrb[0].mxu0
    %v1294 = vpop.f32.mrb[0].mxu0
    %v1295 = vadd.f32 %v585, %v1294
    %v1296 = vpop.f32.mrb[0].mxu0
    %1297 = vdwg.mxu0
    %1298 = vadd.xlane.f32.xlu0 %v1292
    %v1299 = vpop.xlane.xlu0 %1298
    %1300 = vadd.xlane.f32.xlu0 %v1295
    %v1301 = vpop.xlane.xlu0 %1300
    %v1302 = vmul.f32 %v1292, %v1292
    %v1303 = vmul.f32 %v1295, %v1295
    %1304 = vadd.xlane.f32.xlu0 %v1302
    %v1305 = vpop.xlane.xlu0 %1304
    %1306 = vadd.xlane.f32.xlu0 %v1303
    %v1307 = vpop.xlane.xlu0 %1306
    %v1308 = vmul.f32 %v1299, 0.03125
    %v1309 = vmul.f32 %v1301, 0.03125
    %v1310 = vmul.f32 %v1305, 0.03125
    %v1311 = vmul.f32 %v1307, 0.03125
    %v1312 = vmul.f32 %v1308, %v1308
    %v1313 = vmul.f32 %v1309, %v1309
    %v1314 = vsub.f32 %v1310, %v1312
    %v1315 = vsub.f32 %v1311, %v1313
    %v1316 = vmax.f32 %v1314, 0.0
    %v1317 = vmax.f32 %v1315, 0.0
    %v1318 = vsub.f32 %v1292, %v1308
    %v1319 = vsub.f32 %v1295, %v1309
    %v1320 = vadd.f32 %v1316, 1e-05
    %v1321 = vadd.f32 %v1317, 1e-05
    %v1322 = vrsqrt.pop %v1320
    %v1323 = vrsqrt.pop %v1321
    %v1324 = vmul.f32 %v1318, %v1322
    %v1325 = vmul.f32 %v1319, %v1323
    %v1326 = vmul.f32 %v1324, %v592
    %v1327 = vmul.f32 %v1325, %v592
    %v1328 = vadd.f32 %v1326, %v599
    %v1329 = vadd.f32 %v1327, %v599
    %v1330 = vadd.f32 %v1255, %v1328
    %v1331 = vadd.f32 %v1256, %v1329
    %v1332 = vmul.f32 %v631, %v1224
    %v1333 = vmul.f32 %v631, %v1225
    %v1334 = vmul.f32 %v638, %v1330
    %v1335 = vmul.f32 %v638, %v1331
    %v1336 = vadd.f32 %v1332, %v1334
    %v1337 = vadd.f32 %v1333, %v1335
    %v1338 = vmul.f32 %v618, %v1230
    %v1339 = vmul.f32 %v618, %v1231
    %v1340 = vmul.f32 %v625, %v1336
    %v1341 = vmul.f32 %v625, %v1337
    %v1342 = vadd.f32 %v1338, %v1340
    %v1343 = vadd.f32 %v1339, %v1341
    %v1344 = vsub.f32 %v1342, 0.5
    %v1345 = vsub.f32 %v1343, 0.5
    %vm1346 = vcmp.gt.f32.partialorder %v1344, 0.0
    %vm1347 = vcmp.gt.f32.partialorder %v1345, 0.0
    %v1348 = vsel %vm1346, 1, 0
    %v1349 = vsel %vm1347, 1, 0
    %v1350 = vcvt.s32.f32 %v1348
    %v1351 = vcvt.s32.f32 %v1349
    %v1352 = vpack.c.bf16 %v1351, %v1350
    %v1354 = vunpack.c.l.b16 %v1352
    %v1355 = vunpack.c.h.b16 %v1352
    %v1356 = vpack.c.b16 %v1354, %v1354
    %v1357 = vpack.c.b16 %v1355, %v1355
    %s1360 = scalar_lea.vmem [#allocation11], 40
    %1361 = vst [vmem:[%s1360] sm:$0xf] %v1356
    %1362 = vst [vmem:[%s1360 + $0x4] sm:$0xf] %v1357
    %v1363 = vadd.f32 %v1251, %v1350
    %v1364 = vadd.f32 %v1252, %v1351
    %s1365 = scalar_lea.vmem [#allocation2], 48
    %v1366 = vld [vmem:[%s1365] sm:$0xff]
    %v1367 = vunpack.c.l.bf16 %v1366
    %v1368 = vunpack.c.h.bf16 %v1366
    %1369 = vmatprep.subr.bf16.mxu0 0
    %1370 = vmatpush1.bf16.msra.mxu0 %v682
    %1371 = vmatprep.subr.bf16.mxu0 0
    %1372 = vmatpush1.bf16.msra.mxu0 %v683
    %1373 = vmatprep.subr.bf16.mxu0 0
    %1374 = vmatpush1.bf16.msra.mxu0 %v684
    %1375 = vmatprep.subr.bf16.mxu0 0
    %1376 = vmatpush1.bf16.msra.mxu0 %v685
    %1377 = vmatprep.subr.bf16.mxu0 0
    %1378 = vmatpush1.bf16.msra.mxu0 %v686
    %1379 = vmatprep.subr.bf16.mxu0 0
    %1380 = vmatpush1.bf16.msra.mxu0 %v687
    %1381 = vmatprep.subr.bf16.mxu0 0
    %1382 = vmatpush1.bf16.msra.mxu0 %v688
    %1383 = vmatprep.subr.bf16.mxu0 0
    %1384 = vmatpush1.bf16.msra.mxu0 %v689
    %1385 = vmatprep.subr.bf16.mxu0 0
    %1386 = vmatpush1.bf16.msra.mxu0 0
    %1387 = vmatprep.subr.bf16.mxu0 0
    %1388 = vmatpush1.bf16.msra.mxu0 0
    %1389 = vmatprep.subr.bf16.mxu0 0
    %1390 = vmatpush1.bf16.msra.mxu0 0
    %1391 = vmatprep.subr.bf16.mxu0 0
    %1392 = vmatpush1.bf16.msra.mxu0 0
    %1393 = vmatprep.subr.bf16.mxu0 0
    %1394 = vmatpush1.bf16.msra.mxu0 0
    %1395 = vmatprep.subr.bf16.mxu0 0
    %1396 = vmatpush1.bf16.msra.mxu0 0
    %1397 = vmatprep.subr.bf16.mxu0 0
    %1398 = vmatpush1.bf16.msra.mxu0 0
    %1399 = vmatprep.subr.bf16.mxu0 0
    %1400 = vmatpush1.bf16.msra.mxu0 0
    %1401 = vmatprep.mubr.bf16.mxu0 0
    %1402 = vmatmul.mubr.bf16.gmra.mrb[0].mxu0 %v1352
    %v1403 = vpop.f32.mrb[0].mxu0
    %v1404 = vadd.f32 %v585, %v1403
    %v1405 = vpop.f32.mrb[0].mxu0
    %v1406 = vpop.f32.mrb[0].mxu0
    %v1407 = vadd.f32 %v585, %v1406
    %v1408 = vpop.f32.mrb[0].mxu0
    %1409 = vdwg.mxu0
    %1410 = vadd.xlane.f32.xlu0 %v1404
    %v1411 = vpop.xlane.xlu0 %1410
    %1412 = vadd.xlane.f32.xlu0 %v1407
    %v1413 = vpop.xlane.xlu0 %1412
    %v1414 = vmul.f32 %v1404, %v1404
    %v1415 = vmul.f32 %v1407, %v1407
    %1416 = vadd.xlane.f32.xlu0 %v1414
    %v1417 = vpop.xlane.xlu0 %1416
    %1418 = vadd.xlane.f32.xlu0 %v1415
    %v1419 = vpop.xlane.xlu0 %1418
    %v1420 = vmul.f32 %v1411, 0.03125
    %v1421 = vmul.f32 %v1413, 0.03125
    %v1422 = vmul.f32 %v1417, 0.03125
    %v1423 = vmul.f32 %v1419, 0.03125
    %v1424 = vmul.f32 %v1420, %v1420
    %v1425 = vmul.f32 %v1421, %v1421
    %v1426 = vsub.f32 %v1422, %v1424
    %v1427 = vsub.f32 %v1423, %v1425
    %v1428 = vmax.f32 %v1426, 0.0
    %v1429 = vmax.f32 %v1427, 0.0
    %v1430 = vsub.f32 %v1404, %v1420
    %v1431 = vsub.f32 %v1407, %v1421
    %v1432 = vadd.f32 %v1428, 1e-05
    %v1433 = vadd.f32 %v1429, 1e-05
    %v1434 = vrsqrt.pop %v1432
    %v1435 = vrsqrt.pop %v1433
    %v1436 = vmul.f32 %v1430, %v1434
    %v1437 = vmul.f32 %v1431, %v1435
    %v1438 = vmul.f32 %v1436, %v592
    %v1439 = vmul.f32 %v1437, %v592
    %v1440 = vadd.f32 %v1438, %v599
    %v1441 = vadd.f32 %v1439, %v599
    %v1442 = vadd.f32 %v1367, %v1440
    %v1443 = vadd.f32 %v1368, %v1441
    %v1444 = vmul.f32 %v631, %v1336
    %v1445 = vmul.f32 %v631, %v1337
    %v1446 = vmul.f32 %v638, %v1442
    %v1447 = vmul.f32 %v638, %v1443
    %v1448 = vadd.f32 %v1444, %v1446
    %v1449 = vadd.f32 %v1445, %v1447
    %v1450 = vmul.f32 %v618, %v1342
    %v1451 = vmul.f32 %v618, %v1343
    %v1452 = vmul.f32 %v625, %v1448
    %v1453 = vmul.f32 %v625, %v1449
    %v1454 = vadd.f32 %v1450, %v1452
    %v1455 = vadd.f32 %v1451, %v1453
    %v1456 = vsub.f32 %v1454, 0.5
    %v1457 = vsub.f32 %v1455, 0.5
    %vm1458 = vcmp.gt.f32.partialorder %v1456, 0.0
    %vm1459 = vcmp.gt.f32.partialorder %v1457, 0.0
    %v1460 = vsel %vm1458, 1, 0
    %v1461 = vsel %vm1459, 1, 0
    %v1462 = vcvt.s32.f32 %v1460
    %v1463 = vcvt.s32.f32 %v1461
    %v1464 = vpack.c.bf16 %v1463, %v1462
    %v1466 = vunpack.c.l.b16 %v1464
    %v1467 = vunpack.c.h.b16 %v1464
    %v1468 = vpack.c.b16 %v1466, %v1466
    %v1469 = vpack.c.b16 %v1467, %v1467
    %s1472 = scalar_lea.vmem [#allocation11], 48
    %1473 = vst [vmem:[%s1472] sm:$0xf] %v1468
    %1474 = vst [vmem:[%s1472 + $0x4] sm:$0xf] %v1469
    %v1475 = vadd.f32 %v1363, %v1462
    %v1476 = vadd.f32 %v1364, %v1463
    %s1477 = scalar_lea.vmem [#allocation2], 56
    %v1478 = vld [vmem:[%s1477] sm:$0xff]
    %v1479 = vunpack.c.l.bf16 %v1478
    %v1480 = vunpack.c.h.bf16 %v1478
    %1481 = vmatprep.subr.bf16.mxu0 0
    %1482 = vmatpush1.bf16.msra.mxu0 %v682
    %1483 = vmatprep.subr.bf16.mxu0 0
    %1484 = vmatpush1.bf16.msra.mxu0 %v683
    %1485 = vmatprep.subr.bf16.mxu0 0
    %1486 = vmatpush1.bf16.msra.mxu0 %v684
    %1487 = vmatprep.subr.bf16.mxu0 0
    %1488 = vmatpush1.bf16.msra.mxu0 %v685
    %1489 = vmatprep.subr.bf16.mxu0 0
    %1490 = vmatpush1.bf16.msra.mxu0 %v686
    %1491 = vmatprep.subr.bf16.mxu0 0
    %1492 = vmatpush1.bf16.msra.mxu0 %v687
    %1493 = vmatprep.subr.bf16.mxu0 0
    %1494 = vmatpush1.bf16.msra.mxu0 %v688
    %1495 = vmatprep.subr.bf16.mxu0 0
    %1496 = vmatpush1.bf16.msra.mxu0 %v689
    %1497 = vmatprep.subr.bf16.mxu0 0
    %1498 = vmatpush1.bf16.msra.mxu0 0
    %1499 = vmatprep.subr.bf16.mxu0 0
    %1500 = vmatpush1.bf16.msra.mxu0 0
    %1501 = vmatprep.subr.bf16.mxu0 0
    %1502 = vmatpush1.bf16.msra.mxu0 0
    %1503 = vmatprep.subr.bf16.mxu0 0
    %1504 = vmatpush1.bf16.msra.mxu0 0
    %1505 = vmatprep.subr.bf16.mxu0 0
    %1506 = vmatpush1.bf16.msra.mxu0 0
    %1507 = vmatprep.subr.bf16.mxu0 0
    %1508 = vmatpush1.bf16.msra.mxu0 0
    %1509 = vmatprep.subr.bf16.mxu0 0
    %1510 = vmatpush1.bf16.msra.mxu0 0
    %1511 = vmatprep.subr.bf16.mxu0 0
    %1512 = vmatpush1.bf16.msra.mxu0 0
    %1513 = vmatprep.mubr.bf16.mxu0 0
    %1514 = vmatmul.mubr.bf16.gmra.mrb[0].mxu0 %v1464
    %v1515 = vpop.f32.mrb[0].mxu0
    %v1516 = vadd.f32 %v585, %v1515
    %v1517 = vpop.f32.mrb[0].mxu0
    %v1518 = vpop.f32.mrb[0].mxu0
    %v1519 = vadd.f32 %v585, %v1518
    %v1520 = vpop.f32.mrb[0].mxu0
    %1521 = vdwg.mxu0
    %1522 = vadd.xlane.f32.xlu0 %v1516
    %v1523 = vpop.xlane.xlu0 %1522
    %1524 = vadd.xlane.f32.xlu0 %v1519
    %v1525 = vpop.xlane.xlu0 %1524
    %v1526 = vmul.f32 %v1516, %v1516
    %v1527 = vmul.f32 %v1519, %v1519
    %1528 = vadd.xlane.f32.xlu0 %v1526
    %v1529 = vpop.xlane.xlu0 %1528
    %1530 = vadd.xlane.f32.xlu0 %v1527
    %v1531 = vpop.xlane.xlu0 %1530
    %v1532 = vmul.f32 %v1523, 0.03125
    %v1533 = vmul.f32 %v1525, 0.03125
    %v1534 = vmul.f32 %v1529, 0.03125
    %v1535 = vmul.f32 %v1531, 0.03125
    %v1536 = vmul.f32 %v1532, %v1532
    %v1537 = vmul.f32 %v1533, %v1533
    %v1538 = vsub.f32 %v1534, %v1536
    %v1539 = vsub.f32 %v1535, %v1537
    %v1540 = vmax.f32 %v1538, 0.0
    %v1541 = vmax.f32 %v1539, 0.0
    %v1542 = vsub.f32 %v1516, %v1532
    %v1543 = vsub.f32 %v1519, %v1533
    %v1544 = vadd.f32 %v1540, 1e-05
    %v1545 = vadd.f32 %v1541, 1e-05
    %v1546 = vrsqrt.pop %v1544
    %v1547 = vrsqrt.pop %v1545
    %v1548 = vmul.f32 %v1542, %v1546
    %v1549 = vmul.f32 %v1543, %v1547
    %v1550 = vmul.f32 %v1548, %v592
    %v1551 = vmul.f32 %v1549, %v592
    %v1552 = vadd.f32 %v1550, %v599
    %v1553 = vadd.f32 %v1551, %v599
    %v1554 = vadd.f32 %v1479, %v1552
    %v1555 = vadd.f32 %v1480, %v1553
    %v1556 = vmul.f32 %v631, %v1448
    %v1557 = vmul.f32 %v631, %v1449
    %v1558 = vmul.f32 %v638, %v1554
    %v1559 = vmul.f32 %v638, %v1555
    %v1560 = vadd.f32 %v1556, %v1558
    %v1561 = vadd.f32 %v1557, %v1559
    %v1562 = vmul.f32 %v618, %v1454
    %v1563 = vmul.f32 %v618, %v1455
    %v1564 = vmul.f32 %v625, %v1560
    %v1565 = vmul.f32 %v625, %v1561
    %v1566 = vadd.f32 %v1562, %v1564
    %v1567 = vadd.f32 %v1563, %v1565
    %v1568 = vsub.f32 %v1566, 0.5
    %v1569 = vsub.f32 %v1567, 0.5
    %vm1570 = vcmp.gt.f32.partialorder %v1568, 0.0
    %vm1571 = vcmp.gt.f32.partialorder %v1569, 0.0
    %v1572 = vsel %vm1570, 1, 0
    %v1573 = vsel %vm1571, 1, 0
    %v1574 = vcvt.s32.f32 %v1572
    %v1575 = vcvt.s32.f32 %v1573
    %v1576 = vpack.c.bf16 %v1575, %v1574
    %v1578 = vunpack.c.l.b16 %v1576
    %v1579 = vunpack.c.h.b16 %v1576
    %v1580 = vpack.c.b16 %v1578, %v1578
    %v1581 = vpack.c.b16 %v1579, %v1579
    %s1584 = scalar_lea.vmem [#allocation11], 56
    %1585 = vst [vmem:[%s1584] sm:$0xf] %v1580
    %1586 = vst [vmem:[%s1584 + $0x4] sm:$0xf] %v1581
    %v1587 = vadd.f32 %v1475, %v1574
    %v1588 = vadd.f32 %v1476, %v1575
    %1589 = vst [vmem:[#allocation3] sm:$0xff] %v1566
    %1590 = vst [vmem:[#allocation3 + $0x8] sm:$0xff] %v1567
    %1591 = vst [vmem:[#allocation4] sm:$0xff] %v1560
    %1592 = vst [vmem:[#allocation4 + $0x8] sm:$0xff] %v1561
    %1593 = vst [vmem:[#allocation5] sm:$0xff] %v1576
    %1594 = vst [vmem:[#allocation6] sm:$0xff] %v1587
    %1595 = vst [vmem:[#allocation6 + $0x8] sm:$0xff] %v1588
    // Predicated region
    $region74: #{tpu_custom_call.1} parent=1 // pred_check
      %p1596 = pneg %p72
    $region75: #{tpu_custom_call.1} parent=1 // pred_check_branch
      %1598 = sbr.rel (%p1596) target = $region77
    $region76: #{tpu_custom_call.1} parent=1 // pred_region
      %v1599 = vld [vmem:[#allocation6] sm:$0xff]
      %v1600 = vld [vmem:[#allocation6 + $0x8] sm:$0xff]
      %v1601 = vmul.f32 %v1599, 0.125
      %v1602 = vmul.f32 %v1600, 0.125
      %v1603 = vld [vmem:[%s12] sm:$0xff]
      %v1604 = vld [vmem:[%s12 + $0x8] sm:$0xff]
      %v1605 = vld [vmem:[%s12 + $0x10] sm:$0xff]
      %v1606 = vld [vmem:[%s12 + $0x18] sm:$0xff]
      %v1607 = vld [vmem:[%s12 + $0x20] sm:$0xff]
      %v1608 = vld [vmem:[%s12 + $0x28] sm:$0xff]
      %v1609 = vld [vmem:[%s12 + $0x30] sm:$0xff]
      %v1610 = vld [vmem:[%s12 + $0x38] sm:$0xff]
      %v1611 = vld [vmem:[%s12 + $0x40] sm:$0xff]
      %v1612 = vld [vmem:[%s12 + $0x48] sm:$0xff]
      %v1613 = vld [vmem:[%s12 + $0x50] sm:$0xff]
      %v1614 = vld [vmem:[%s12 + $0x58] sm:$0xff]
      %v1615 = vld [vmem:[%s12 + $0x60] sm:$0xff]
      %v1616 = vld [vmem:[%s12 + $0x68] sm:$0xff]
      %v1617 = vld [vmem:[%s12 + $0x70] sm:$0xff]
      %v1618 = vld [vmem:[%s12 + $0x78] sm:$0xff]
      %v1619 = vld [vmem:[%s13] sm:$0x1]
      %v1621 = vlaneseq
      %v1622 = vshrl.u32 %v1621, 7
      %v1623 = vsub.s32 0, %v1622
      %v1624 = vrot.slane %v1619, %v1623
      %1626 = vmatprep.subr.mxu0 0.0
      %1627 = vmatpush1.msra.mxu0 %v1603
      %1628 = vmatprep.subr.mxu0 0.0
      %1629 = vmatpush1.msra.mxu0 %v1604
      %1630 = vmatprep.subr.mxu0 0.0
      %1631 = vmatpush1.msra.mxu0 %v1605
      %1632 = vmatprep.subr.mxu0 0.0
      %1633 = vmatpush1.msra.mxu0 %v1606
      %1634 = vmatprep.subr.mxu0 0.0
      %1635 = vmatpush1.msra.mxu0 %v1607
      %1636 = vmatprep.subr.mxu0 0.0
      %1637 = vmatpush1.msra.mxu0 %v1608
      %1638 = vmatprep.subr.mxu0 0.0
      %1639 = vmatpush1.msra.mxu0 %v1609
      %1640 = vmatprep.subr.mxu0 0.0
      %1641 = vmatpush1.msra.mxu0 %v1610
      %1642 = vmatprep.subr.mxu0 0.0
      %1643 = vmatpush1.msra.mxu0 %v1611
      %1644 = vmatprep.subr.mxu0 0.0
      %1645 = vmatpush1.msra.mxu0 %v1612
      %1646 = vmatprep.subr.mxu0 0.0
      %1647 = vmatpush1.msra.mxu0 %v1613
      %1648 = vmatprep.subr.mxu0 0.0
      %1649 = vmatpush1.msra.mxu0 %v1614
      %1650 = vmatprep.subr.mxu0 0.0
      %1651 = vmatpush1.msra.mxu0 %v1615
      %1652 = vmatprep.subr.mxu0 0.0
      %1653 = vmatpush1.msra.mxu0 %v1616
      %1654 = vmatprep.subr.mxu0 0.0
      %1655 = vmatpush1.msra.mxu0 %v1617
      %1656 = vmatprep.subr.mxu0 0.0
      %1657 = vmatpush1.msra.mxu0 %v1618
      %1658 = vmatprep.subr.mxu0 0.0
      %1659 = vmatpush1.msra.mxu0 0.0
      %1660 = vmatprep.subr.mxu0 0.0
      %1661 = vmatpush1.msra.mxu0 0.0
      %1662 = vmatprep.subr.mxu0 0.0
      %1663 = vmatpush1.msra.mxu0 0.0
      %1664 = vmatprep.subr.mxu0 0.0
      %1665 = vmatpush1.msra.mxu0 0.0
      %1666 = vmatprep.subr.mxu0 0.0
      %1667 = vmatpush1.msra.mxu0 0.0
      %1668 = vmatprep.subr.mxu0 0.0
      %1669 = vmatpush1.msra.mxu0 0.0
      %1670 = vmatprep.subr.mxu0 0.0
      %1671 = vmatpush1.msra.mxu0 0.0
      %1672 = vmatprep.subr.mxu0 0.0
      %1673 = vmatpush1.msra.mxu0 0.0
      %1674 = vmatprep.subr.mxu0 0.0
      %1675 = vmatpush1.msra.mxu0 0.0
      %1676 = vmatprep.subr.mxu0 0.0
      %1677 = vmatpush1.msra.mxu0 0.0
      %1678 = vmatprep.subr.mxu0 0.0
      %1679 = vmatpush1.msra.mxu0 0.0
      %1680 = vmatprep.subr.mxu0 0.0
      %1681 = vmatpush1.msra.mxu0 0.0
      %1682 = vmatprep.subr.mxu0 0.0
      %1683 = vmatpush1.msra.mxu0 0.0
      %1684 = vmatprep.subr.mxu0 0.0
      %1685 = vmatpush1.msra.mxu0 0.0
      %1686 = vmatprep.subr.mxu0 0.0
      %1687 = vmatpush1.msra.mxu0 0.0
      %1688 = vmatprep.subr.mxu0 0.0
      %1689 = vmatpush1.msra.mxu0 0.0
      %1690 = vmatprep.mubr.f32.mxu0 0.0
      %1691 = vmatmul.mubr.f32.gmra.mrb[0].mxu0 %v1601
      %v1692 = vpop.f32.mrb[0].mxu0
      %v1693 = vadd.f32 %v1624, %v1692
      %v1694 = vpop.f32.mrb[0].mxu0
      %1695 = vmatprep.mubr.f32.mxu0 0.0
      %1696 = vmatmul.mubr.f32.gmra.mrb[0].mxu0 %v1602
      %v1697 = vpop.f32.mrb[0].mxu0
      %v1698 = vadd.f32 %v1624, %v1697
      %v1699 = vpop.f32.mrb[0].mxu0
      %1700 = vdwg.mxu0
      %v1701 = vld [vmem:[%s14] sm:$0x1]
      %v1702 = vld [vmem:[%s15] sm:$0x1]
      %vm1703 = vcmask 80896
      %v1704 = vsel %vm1703, %v1693, 0.0
      %1705 = vadd.xlane.f32.xlu0 %v1704
      %v1706 = vpop.xlane.xlu0 %1705
      %v1707 = vsel %vm1703, %v1698, 0.0
      %1708 = vadd.xlane.f32.xlu0 %v1707
      %v1709 = vpop.xlane.xlu0 %1708
      %v1710 = vmul.f32 %v1693, %v1693
      %v1711 = vmul.f32 %v1698, %v1698
      %v1712 = vsel %vm1703, %v1710, 0.0
      %1713 = vadd.xlane.f32.xlu0 %v1712
      %v1714 = vpop.xlane.xlu0 %1713
      %v1715 = vsel %vm1703, %v1711, 0.0
      %1716 = vadd.xlane.f32.xlu0 %v1715
      %v1717 = vpop.xlane.xlu0 %1716
      %v1718 = vmul.f32 %v1706, 0.1
      %v1719 = vmul.f32 %v1709, 0.1
      %v1720 = vmul.f32 %v1714, 0.1
      %v1721 = vmul.f32 %v1717, 0.1
      %v1722 = vmul.f32 %v1718, %v1718
      %v1723 = vmul.f32 %v1719, %v1719
      %v1724 = vsub.f32 %v1720, %v1722
      %v1725 = vsub.f32 %v1721, %v1723
      %v1726 = vmax.f32 %v1724, 0.0
      %v1727 = vmax.f32 %v1725, 0.0
      %v1728 = vsub.f32 %v1693, %v1718
      %v1729 = vsub.f32 %v1698, %v1719
      %v1730 = vadd.f32 %v1726, 1e-05
      %v1731 = vadd.f32 %v1727, 1e-05
      %v1732 = vrsqrt.pop %v1730
      %v1733 = vrsqrt.pop %v1731
      %v1734 = vmul.f32 %v1728, %v1732
      %v1735 = vmul.f32 %v1729, %v1733
      %v1737 = vlaneseq
      %v1738 = vshrl.u32 %v1737, 7
      %v1739 = vsub.s32 0, %v1738
      %v1740 = vrot.slane %v1701, %v1739
      %v1742 = vmul.f32 %v1734, %v1740
      %v1743 = vmul.f32 %v1735, %v1740
      %v1745 = vlaneseq
      %v1746 = vshrl.u32 %v1745, 7
      %v1747 = vsub.s32 0, %v1746
      %v1748 = vrot.slane %v1702, %v1747
      %v1750 = vadd.f32 %v1742, %v1748
      %v1751 = vadd.f32 %v1743, %v1748
      %1752 = vst.msk [vmem:[#allocation10] sm:$0xff] %vm1703, %v1750
      %1753 = vst.msk [vmem:[#allocation10 + $0x8] sm:$0xff] %vm1703, %v1751
    $region77: #{tpu_custom_call.1} parent=1 // pred_fallthru
      _
    // Predicated region
    $region78: #{tpu_custom_call.1} parent=1 // pred_check
      _
    $region79: #{tpu_custom_call.1} parent=1 // pred_check_branch
      %1755 = sbr.rel (0) target = $region81
    $region80: #{tpu_custom_call.1} parent=1 // pred_region
      %s1757 = ssub.s32 256, 256
      %1758 = vsyncadd [#allocation9], %s1757
      %s1759 = sshll.u32 [#allocation10], 4
      %s1760 = int_to_ptr.vmem [resolvable:$true] %s1759
      %1765 = dma.vmem_to_hbm [thread:$0]  %s1760, 256, %s16, [#allocation9], 128, 128, 8
    $region81: #{tpu_custom_call.1} parent=1 // pred_fallthru
      _
    // Predicated region
    $region82: #{tpu_custom_call.1} parent=1 // pred_check
      _
    $region83: #{tpu_custom_call.1} parent=1 // pred_check_branch
      %1767 = sbr.rel (0) target = $region85
    $region84: #{tpu_custom_call.1} parent=1 // pred_region
      %s1769 = ssub.s32 1024, 1024
      %1770 = vsyncadd [#allocation12], %s1769
      %s1771 = sshll.u32 [#allocation11], 4
      %s1772 = int_to_ptr.vmem [resolvable:$true] %s1771
      %1777 = dma.vmem_to_hbm [thread:$0]  %s1772, 1024, %s17, [#allocation12], 64, 64, 4
    $region85: #{tpu_custom_call.1} parent=1 // pred_fallthru
      _
    // Predicated region
    $region86: #{tpu_custom_call.1} parent=1 // pred_check
      _
    $region87: #{tpu_custom_call.1} parent=1 // pred_check_branch
      %1779 = sbr.rel (0) target = $region89
    $region88: #{tpu_custom_call.1} parent=1 // pred_region
      %1780 = dma.done [#allocation9], 256
    $region89: #{tpu_custom_call.1} parent=1 // pred_fallthru
      _
    // Predicated region
    $region90: #{tpu_custom_call.1} parent=1 // pred_check
      _
    $region91: #{tpu_custom_call.1} parent=1 // pred_check_branch
      %1782 = sbr.rel (0) target = $region93
    $region92: #{tpu_custom_call.1} parent=1 // pred_region
      %1783 = dma.done [#allocation12], 1024
    $region93: #{tpu_custom_call.1} parent=1 // pred_fallthru
      _
    %1784 = vsyncpa [#allocation8], 1
    %1785 = vsyncpa [#allocation9], 1
    %1786 = vsyncpa [#allocation12], 1

</llo_original>
